<compile_context>
chip_gen: v6e
topology: v6e:2x2x1
jax: 0.10.0
libtpu: 0.0.40
codegen_flags: <defaults>
</compile_context>

<pallas_src>
import numpy as np
import jax
import jax.numpy as jnp
from jax import lax
from jax.experimental import pallas as pl
from jax.experimental.pallas import tpu as pltpu


# bf16 Gram operands (f32 accumulate).  ~0.4% relative error in W; set False
# to recover the exact-f32 path if the loss tolerance requires it.
_USE_BF16_GRAM = True


# ----------------------------- Pallas kernel ------------------------------ #
def _sym_laplacian_kernel(x_ref, lap_ref):
    # x_ref block: (Bt, N, C_pad) f32 ; lap_ref block: (Bt, N, N) f32
    x = x_ref[...]

    # F.normalize(p=2, dim=-1): zero feature padding leaves the L2 norm
    # unchanged; fused rsqrt keeps the normalize on the EUP slot.
    ss = jnp.sum(x * x, axis=-1, keepdims=True)               # (Bt, N, 1)
    xn = x * lax.rsqrt(jnp.maximum(ss, 1e-24))

    # Affinity W = relu(Xn Xn^T): batched MXU matmul over the small feature
    # contraction.  (The reference's W / W.max() is dropped: max(relu(cosine
    # Gram)) == 1 and the normalized Laplacian is scale invariant anyway.)
    xg = xn.astype(jnp.bfloat16) if _USE_BF16_GRAM else xn
    w = jnp.einsum('bnc,bmc->bnm', xg, xg,
                   preferred_element_type=jnp.float32)        # (Bt, N, N)
    w = jnp.maximum(w, 0.0)

    # Degree scales.  TODO(synk): `utils.get_diagonalnnp` is undefined in the
    # reference; assumed to be the standard degree diagonal.  W is symmetric,
    # so column degrees == row degrees; the row-layout copy is an XLU
    # cross-sublane reduce (MXU stays free).  The 1e-12 floor regularizes
    # zero-degree tokens, a case where the reference generalized eigsh
    # (singular D) is ill-posed.
    drow = jnp.sum(w, axis=2, keepdims=True)                  # (Bt, N, 1)
    dcol = jnp.sum(w, axis=1, keepdims=True)                  # (Bt, 1, N)
    nsrow = -lax.rsqrt(jnp.maximum(drow, 1e-12))              # -D^-1/2 (rows)
    scol = lax.rsqrt(jnp.maximum(dcol, 1e-12))                # D^-1/2 (cols)
    v = w * nsrow * scol                                      # -D^-1/2 W D^-1/2

    # L = I - D^-1/2 W D^-1/2.  Identity folded into the store; v already
    # carries the minus sign so this is a single select, no N^2 negate.
    row = lax.broadcasted_iota(jnp.int32, v.shape, 1)
    col = lax.broadcasted_iota(jnp.int32, v.shape, 2)
    lap_ref[...] = jnp.where(row == col, 1.0 + v, v)


def _vmem_limit_bytes(bt, n, c_pad):
    """Generation-aware VMEM request with headroom for in-kernel temporaries."""
    try:
        cap = int(getattr(pltpu.get_tpu_info(), "vmem_capacity_bytes", 64 << 20))
    except Exception:
        cap = 64 << 20                        # conservative: v7x physical VMEM
    ceiling = (cap * 3) // 4                  # 48 MiB on v7x, 96 MiB on v5e/v6e
    n_sub = ((n + 7) // 8) * 8
    n_lane = ((n + 127) // 128) * 128
    in_blk = bt * n_sub * max(c_pad, 128) * 4     # input tile (lane padded)
    out_blk = bt * n_sub * n_lane * 4             # output tile
    # Double-buffered I/O + ~3 live (Bt,N,N) f32 temporaries + Mosaic scratch.
    budget = 2 * (in_blk + out_blk) + 3 * out_blk + (2 << 20)
    return int(min(ceiling, max(budget, 32 << 20)))


def sym_laplacian(x):
    """x: (B, N, C) float32 -> (B, N, N) symmetric normalized Laplacians."""
    B, N, C = x.shape
    c_pad = max(8, ((C + 7) // 8) * 8)        # tiny sublane pad; NOT 128
    x = x.astype(jnp.float32)
    if c_pad != C:
        x = jnp.pad(x, ((0, 0), (0, 0), (0, c_pad - C)))

    # Several batch items per grid step when N is small; one per step once the
    # N^2 tiles get big.  (For N < 128 the per-step overhead / masked-lane
    # stores dominate; at these sizes the downstream eigh dominates anyway.)
    bt = 1 if N >= 256 else min(B, max(1, 256 // N))
    b_pad = int(pl.cdiv(B, bt)) * bt
    if b_pad != B:
        # Zero-padded batch rows produce L = I and are sliced off below.
        x = jnp.pad(x, ((0, b_pad - B), (0, 0), (0, 0)))

    # TODO(synk): for N >~ 1.2k (v7x, 64 MiB VMEM) switch to a two-pass,
    # row-tiled structure: pass 1 streams row tiles of relu(Xn Xn^T) keeping
    # only the degree vector, pass 2 writes (tm, N) Laplacian tiles with the
    # degree vector held in VMEM -> peak VMEM O(tm*N) instead of O(N^2).
    lap = pl.pallas_call(
        _sym_laplacian_kernel,
        out_shape=jax.ShapeDtypeStruct((b_pad, N, N), jnp.float32),
        grid_spec=pltpu.PrefetchScalarGridSpec(
            num_scalar_prefetch=0,
            grid=(b_pad // bt,),
            in_specs=[pl.BlockSpec((bt, N, c_pad), lambda g: (g, 0, 0))],
            out_specs=pl.BlockSpec((bt, N, N), lambda g: (g, 0, 0)),
        ),
        compiler_params=pltpu.CompilerParams(
            dimension_semantics=("parallel",),
            vmem_limit_bytes=_vmem_limit_bytes(bt, N, c_pad)),
    )(x)
    return lap[:B] if b_pad != B else lap


# ------------------------------- glue (JAX) -------------------------------- #
def _bilinear_matrix(in_size, out_size):
    """Row-interpolation matrix matching F.interpolate(bilinear, align_corners=False)."""
    A = np.zeros((out_size, in_size), dtype=np.float32)
    scale = in_size / out_size
    for i in range(out_size):
        src = max((i + 0.5) * scale - 0.5, 0.0)
        x0 = min(int(np.floor(src)), in_size - 1)
        x1 = min(x0 + 1, in_size - 1)
        w1 = src - x0
        A[i, x0] += 1.0 - w1
        A[i, x1] += w1
    return A


def _tokens(feats):
    """NCHW -> 4x-downsampled (B, N, C) token matrices (pure-JAX glue)."""
    # TODO(synk): feeding tokens as (B, C, N) would make the kernel's input
    # block lane-dense; kept (B, N, C) pending MLIR verification of the
    # alternative Gram operand layout.
    B, C, H, W = feats.shape
    nH, nW = H // 4, W // 4
    A_h = jnp.asarray(_bilinear_matrix(H, nH))
    A_w = jnp.asarray(_bilinear_matrix(W, nW))
    ds = jnp.einsum('ph,bchw,qw->bcpq', A_h, feats.astype(jnp.float32), A_w)
    return ds.reshape(B, C, nH * nW).transpose(0, 2, 1)       # (B, N, C)


def geteig(feats, K):
    """Reference-equivalent geteig for a single (B, C, H, W) group."""
    lap = sym_laplacian(_tokens(feats))
    # TODO(synk): scipy.sparse.linalg.eigsh (shift-invert generalized solver)
    # has no Pallas equivalent; dense jnp.linalg.eigh of the equivalent
    # symmetric normalized Laplacian yields the same eigenvalues.
    return jnp.linalg.eigh(lap)[0][:, :K]                     # K smallest


def landaloss(feats, K):
    B, C, H, W = feats.shape
    tok = _tokens(feats)                                      # (B, N, C)

    g1 = tok[:, :, 0:1]          # feats[:, :1]   -> (B, N, 1)
    g2 = tok[:, :, 1:2]          # feats[:, 1:2]  -> (B, N, 1)
    g3 = tok[:2:3]               # NOTE: reproduces reference's batch slice
                                 # feats[:2:3]    -> (1, N, C)

    # Fuse the three geteig paths: pad to a common feature width, stack on the
    # grid axis, run ONE pallas_call and ONE batched eigh.
    c_common = max(g1.shape[-1], g2.shape[-1], g3.shape[-1])
    pad_c = lambda g: jnp.pad(g, ((0, 0), (0, 0), (0, c_common - g.shape[-1])))
    x = jnp.concatenate([pad_c(g1), pad_c(g2), pad_c(g3)], axis=0)

    lap = sym_laplacian(x)                                    # (2B + b3, N, N)
    evals = jnp.linalg.eigh(lap)[0][:, :K]                    # K smallest each

    b3 = g3.shape[0]
    lan1 = evals[0:B]
    lan2 = evals[B:2 * B]
    lan3 = evals[2 * B:2 * B + b3]

    mse = lambda a, b: jnp.mean((a - b) ** 2)   # broadcasts like F.mse_loss
    loss = mse(lan1, lan2)
    loss = loss + mse(lan1, lan3)
    loss = loss + mse(lan2, lan3)
    return loss * 5.0


if __name__ == "__main__":
    key = jax.random.PRNGKey(0)
    feats = jax.random.normal(key, (2, 4, 16, 16), dtype=jnp.float32)
    K = 4
    loss = jax.jit(landaloss, static_argnums=1)(feats, K)
    jax.block_until_ready(loss)
    assert loss.shape == () and bool(jnp.isfinite(loss))
    print("KERNEL_OK")
</pallas_src>

<mosaic_0001>
module attributes {stable_mosaic.version = 11 : i64} {
  func.func @_sym_laplacian_kernel(%arg0: i32, %arg1: memref<5x16x8xf32, #tpu.memory_space<vmem>>, %arg2: memref<5x16x16xf32, #tpu.memory_space<vmem>>) attributes {dimension_semantics = [#tpu.dimension_semantics<parallel>], iteration_bounds = array<i64: 1>, scalar_prefetch = 0 : i64, scratch_operands = 0 : i64, tpu.core_type = #tpu.core_type<tc>, window_params = [{transform_indices = @transform_0, window_bounds = array<i64: 5, 16, 8>}, {transform_indices = @transform_1, window_bounds = array<i64: 5, 16, 16>}]} {
    %c0 = arith.constant 0 : index
    %c0_0 = arith.constant 0 : index
    %c0_1 = arith.constant 0 : index
    %0 = vector.load %arg1[%c0, %c0_0, %c0_1] : memref<5x16x8xf32, #tpu.memory_space<vmem>>, vector<5x16x8xf32>
    %1 = arith.mulf %0, %0 : vector<5x16x8xf32>
    %cst = arith.constant dense<0.000000e+00> : vector<5x16xf32>
    %2 = vector.multi_reduction <add>, %1, %cst [2] : vector<5x16x8xf32> to vector<5x16xf32>
    %3 = vector.shape_cast %2 : vector<5x16xf32> to vector<5x16x1xf32>
    %cst_2 = arith.constant 1.000000e-24 : f32
    %4 = vector.broadcast %cst_2 : f32 to vector<5x16x1xf32>
    %5 = arith.maximumf %3, %4 : vector<5x16x1xf32>
    %6 = math.rsqrt %5 : vector<5x16x1xf32>
    %7 = vector.broadcast %6 : vector<5x16x1xf32> to vector<5x16x8xf32>
    %8 = arith.mulf %0, %7 : vector<5x16x8xf32>
    %9 = arith.truncf %8 : vector<5x16x8xf32> to vector<5x16x8xbf16>
    "tpu.trace_start"() <{level = 10 : i32, message = "bnc,bmc->bnm"}> : () -> ()
    %cst_3 = arith.constant dense<0.000000e+00> : vector<5x16x16xf32>
    %10 = tpu.matmul %9, %9, %cst_3 {dimension_numbers = #tpu.dot_dimension_numbers<[2], [2], [1], [1], [0, 0, 0, 1, 1, 1], [0], [0]>} : vector<5x16x8xbf16>, vector<5x16x8xbf16>, vector<5x16x16xf32> -> vector<5x16x16xf32>
    "tpu.trace_stop"() : () -> ()
    %cst_4 = arith.constant 0.000000e+00 : f32
    %11 = vector.broadcast %cst_4 : f32 to vector<5x16x16xf32>
    %12 = arith.maximumf %10, %11 : vector<5x16x16xf32>
    %cst_5 = arith.constant dense<0.000000e+00> : vector<5x16xf32>
    %13 = vector.multi_reduction <add>, %12, %cst_5 [2] : vector<5x16x16xf32> to vector<5x16xf32>
    %14 = vector.shape_cast %13 : vector<5x16xf32> to vector<5x16x1xf32>
    %cst_6 = arith.constant dense<0.000000e+00> : vector<5x16xf32>
    %15 = vector.multi_reduction <add>, %12, %cst_6 [1] : vector<5x16x16xf32> to vector<5x16xf32>
    %16 = vector.shape_cast %15 : vector<5x16xf32> to vector<5x1x16xf32>
    %cst_7 = arith.constant 9.99999996E-13 : f32
    %17 = vector.broadcast %cst_7 : f32 to vector<5x16x1xf32>
    %18 = arith.maximumf %14, %17 : vector<5x16x1xf32>
    %19 = math.rsqrt %18 : vector<5x16x1xf32>
    %cst_8 = arith.constant 0.000000e+00 : f32
    %20 = vector.broadcast %cst_8 : f32 to vector<5x16x1xf32>
    %21 = arith.subf %20, %19 : vector<5x16x1xf32>
    %cst_9 = arith.constant 9.99999996E-13 : f32
    %22 = vector.broadcast %cst_9 : f32 to vector<5x1x16xf32>
    %23 = arith.maximumf %16, %22 : vector<5x1x16xf32>
    %24 = math.rsqrt %23 : vector<5x1x16xf32>
    %25 = vector.broadcast %21 : vector<5x16x1xf32> to vector<5x16x16xf32>
    %26 = arith.mulf %12, %25 : vector<5x16x16xf32>
    %27 = vector.broadcast %24 : vector<5x1x16xf32> to vector<5x16x16xf32>
    %28 = arith.mulf %26, %27 : vector<5x16x16xf32>
    %29 = tpu.iota {dimensions = array<i32: 1>} : vector<5x16x16xi32>
    %30 = tpu.iota {dimensions = array<i32: 2>} : vector<5x16x16xi32>
    %31 = arith.cmpi eq, %29, %30 : vector<5x16x16xi32>
    %cst_10 = arith.constant 1.000000e+00 : f32
    %32 = vector.broadcast %cst_10 : f32 to vector<5x16x16xf32>
    %33 = arith.addf %32, %28 : vector<5x16x16xf32>
    %34 = arith.select %31, %33, %28 : vector<5x16x16xi1>, vector<5x16x16xf32>
    %c0_11 = arith.constant 0 : index
    %c0_12 = arith.constant 0 : index
    %c0_13 = arith.constant 0 : index
    %35 = vector.load %arg2[%c0_11, %c0_12, %c0_13] : memref<5x16x16xf32, #tpu.memory_space<vmem>>, vector<5x16x16xf32>
    tpu.vector_store %arg2[%c0_11, %c0_12, %c0_13], %34 {strides = array<i32>} : memref<5x16x16xf32, #tpu.memory_space<vmem>>, vector<5x16x16xf32>,
    return
  }
  func.func @transform_0(%arg0: i32) -> (i32, i32, i32) {
    %c0_i32 = arith.constant 0 : i32
    %c0_i32_0 = arith.constant 0 : i32
    %c0_i32_1 = arith.constant 0 : i32
    return %arg0, %c0_i32, %c0_i32_0 : i32, i32, i32
  }
  func.func @transform_1(%arg0: i32) -> (i32, i32, i32) {
    %c0_i32 = arith.constant 0 : i32
    %c0_i32_0 = arith.constant 0 : i32
    %c0_i32_1 = arith.constant 0 : i32
    return %arg0, %c0_i32, %c0_i32_0 : i32, i32, i32
  }
}

</mosaic_0001>

<llo_original>
// kernel: custom-call.2
$region0: #{custom-call.2}
  %s0 = inlined_call_operand.vmem [shape: f32[5,8,8], index: 0, kind: input, shape index: {}]
  %s1 = inlined_call_operand.vmem [shape: f32[5,8,8], index: 1, kind: input, shape index: {}]
  %s2 = inlined_call_operand.vmem [shape: f32[5,8,8], index: 2, kind: input, shape index: {}]
  %s3 = inlined_call_operand.vmem [shape: f32[5,8,8], index: 3, kind: input, shape index: {}]
  %s4 = inlined_call_operand.vmem [shape: f32[5,8], index: 4, kind: output, shape index: {0}]
  %s5 = inlined_call_operand.vmem [shape: f32[5,8], index: 5, kind: output, shape index: {1}]
  %s6 = inlined_call_operand.hbm [shape: f32[5,8,8], index: 6, kind: output, shape index: {2}]
  %s7 = inlined_call_operand.hbm [shape: f32[5,8,8], index: 7, kind: output, shape index: {3}]
  %s8 = inlined_call_operand.hbm [shape: f32[5,8,8], index: 8, kind: output, shape index: {4}]
  %s9 = inlined_call_operand.hbm [shape: f32[5,8,8], index: 9, kind: output, shape index: {5}]
  %10 = xla_tuple %s4, %s5, %s6, %s7, %s8, %s9
  $region1: #{custom-call.2} parent=0
    #allocation0 [shape = 'u8[8192]{0}', space=vmem, size = 0x2000, scoped, tag = 'operand span for operand 0']
    #allocation1 [shape = 'u8[8192]{0}', space=vmem, size = 0x2000, scoped, tag = 'operand span for operand 1']
    #allocation2 [shape = 'u8[8192]{0}', space=vmem, size = 0x2000, scoped, tag = 'operand span for operand 2']
    #allocation3 [shape = 'u8[8192]{0}', space=vmem, size = 0x2000, scoped, tag = 'operand span for operand 3']
    #allocation4 [shape = 'u8[8192]{0}', space=vmem, size = 0x2000, scoped, tag = 'operand span for operand 4']
    #allocation5 [shape = 'u8[8192]{0}', space=vmem, size = 0x2000, scoped, tag = 'operand span for operand 5']
    #allocation6 [shape = 'u8[8192]{0}', space=vmem, size = 0x2000, scoped, tag = 'operand span for operand 6']
    #allocation7 [shape = 's32[2]{0}', space=sflag, size = 0x8, scoped, tag = 'scoped memory for custom-call.2']
    #allocation8 [shape = 'u8[8192]{0}', space=vmem, size = 0x2000, scoped, tag = 'operand span for operand 7']
    #allocation9 [shape = 's32[2]{0}', space=sflag, size = 0x8, scoped, tag = 'scoped memory for custom-call.2']
    #allocation10 [shape = 'u8[8192]{0}', space=vmem, size = 0x2000, scoped, tag = 'operand span for operand 8']
    #allocation11 [shape = 'u8[8192]{0}', space=vmem, size = 0x2000, scoped, tag = 'operand span for operand 9']
    #allocation12 [shape = 's32[2]{0}', space=sflag, size = 0x8, scoped, tag = 'scoped memory for custom-call.2']
    %11 = vsyncpa [#allocation7], 0
    %s12 = scalar_lea.sflag [#allocation7], 1
    %13 = vsyncpa %s12, 0
    %14 = vsyncpa [#allocation9], 0
    %s15 = scalar_lea.sflag [#allocation9], 1
    %16 = vsyncpa %s15, 0
    %17 = vsyncpa [#allocation12], 0
    %s18 = scalar_lea.sflag [#allocation12], 1
    %19 = vsyncpa %s18, 0
    loop: start=0, step=1, limit=7
    $region2: #{custom-call.2} parent=1 // loop_pre_header
      _
    $region3: #{custom-call.2} parent=1 // loop_header
      %s21 = sphi 0, %s25
      %p22 = scmp.ge.s32.totalorder %s21, 7
      %s33 = sphi 0, %s35
      %s36 = sphi 0, %s33
      %s37 = sphi 0, %s36
      %s53 = sphi 0, %s37
      %s61 = sphi 0, %s63
      %s64 = sphi 0, %s61
      %s65 = sphi 0, %s64
      %s81 = sphi 0, %s65
    $region4: #{custom-call.2} parent=1 // loop_header_branch
      %24 = sbr.rel (%p22) target = $region8
    $region5: #{custom-call.2} parent=1 // loop_body
      %s26 = ssub.s32 %s21, 1
      %s27 = ssub.s32 %s21, 2
      %s28 = sadd.s32 %s21, 1
      %s29 = sshrl.u32 %s21, 3
      %s30 = sshrl.u32 %s28, 3
      %s31 = ssub.s32 %s29, %s30
      %p32 = scmp.eq.s32.totalorder %s31, 0
      %s34 = sadd.s32 %s33, 1
      %s35 = scalar_select %p32, %s33, %s34
      %p38 = pneg %p32
      %p39 = scmp.eq.s32.totalorder %s21, 4
      %p40 = por %p38, %p39
      %p41 = scmp.ne.s32.totalorder %s33, %s36
      %p42 = scmp.eq.s32.totalorder %s21, 0
      %p43 = por %p41, %p42
      %p44 = scmp.ne.s32.totalorder %s33, %s36
      %p45 = scmp.eq.s32.totalorder %s26, 4
      %p46 = por %p44, %p45
      %p47 = scmp.ne.s32.totalorder %s36, %s37
      %p48 = scmp.eq.s32.totalorder %s26, 0
      %p49 = por %p47, %p48
      %p50 = scmp.ne.s32.totalorder %s36, %s37
      %p51 = scmp.eq.s32.totalorder %s27, 4
      %p52 = por %p50, %p51
      %p54 = scmp.ne.s32.totalorder %s37, %s53
      %p55 = scmp.eq.s32.totalorder %s27, 0
      %p56 = por %p54, %p55
      %s57 = sshrl.u32 %s21, 3
      %s58 = sshrl.u32 %s28, 3
      %s59 = ssub.s32 %s57, %s58
      %p60 = scmp.eq.s32.totalorder %s59, 0
      %s62 = sadd.s32 %s61, 1
      %s63 = scalar_select %p60, %s61, %s62
      %p66 = pneg %p60
      %p67 = scmp.eq.s32.totalorder %s21, 4
      %p68 = por %p66, %p67
      %p69 = scmp.ne.s32.totalorder %s61, %s64
      %p70 = scmp.eq.s32.totalorder %s21, 0
      %p71 = por %p69, %p70
      %p72 = scmp.ne.s32.totalorder %s61, %s64
      %p73 = scmp.eq.s32.totalorder %s26, 4
      %p74 = por %p72, %p73
      %p75 = scmp.ne.s32.totalorder %s64, %s65
      %p76 = scmp.eq.s32.totalorder %s26, 0
      %p77 = por %p75, %p76
      %p78 = scmp.ne.s32.totalorder %s64, %s65
      %p79 = scmp.eq.s32.totalorder %s27, 4
      %p80 = por %p78, %p79
      %p82 = scmp.ne.s32.totalorder %s65, %s81
      %p83 = scmp.eq.s32.totalorder %s27, 0
      %p84 = por %p82, %p83
      %p85 = scmp.le.s32.totalorder 1, %s21
      %p86 = scmp.lt.s32.totalorder %s21, 6
      %p87 = pnand %p85, %p86
      %p88 = pneg %p87
      // Predicated region
      $region9: #{custom-call.2} parent=5 // pred_check
        _
      $region10: #{custom-call.2} parent=5 // pred_check_branch
        %90 = sbr.rel (%p87) target = $region12
      $region11: #{custom-call.2} parent=5 // pred_region
        %s91 = ssub.s32 %s21, 1
      $region12: #{custom-call.2} parent=5 // pred_fallthru
        _
      %p92 = scmp.lt.s32.totalorder %s21, 5
      // Predicated region
      $region13: #{custom-call.2} parent=5 // pred_check
        %p93 = pneg %p92
      $region14: #{custom-call.2} parent=5 // pred_check_branch
        %95 = sbr.rel (%p93) target = $region16
      $region15: #{custom-call.2} parent=5 // pred_region
        %s96 = sand.u32 %s21, 1
        %s97 = sand.u32 %s21, 1
        %s98 = smul.addr %s97, 8
        %s99 = scalar_lea.vmem [#allocation0], %s98
        %s100 = smul.addr %s21, 8
        %s101 = scalar_lea.vmem %s0, %s100
        // Predicated region
        $region17: #{custom-call.2} parent=15 // pred_check
          _
        $region18: #{custom-call.2} parent=15 // pred_check_branch
          %103 = sbr.rel (0) target = $region20
        $region19: #{custom-call.2} parent=15 // pred_region
          // Predicated region
          $region21: #{custom-call.2} parent=19 // pred_check
            _
          $region22: #{custom-call.2} parent=19 // pred_check_branch
            %105 = sbr.rel (0) target = $region24
          $region23: #{custom-call.2} parent=19 // pred_region
            // Predicated region
            $region36: #{custom-call.2} parent=23 // pred_check
              _
            $region37: #{custom-call.2} parent=23 // pred_check_branch
              %121 = sbr.rel (0) target = $region39
            $region38: #{custom-call.2} parent=23 // pred_region
              loop: start=0, step=1, limit=1
              $region40: #{custom-call.2} parent=38 // loop_pre_header
                _
              $region41: #{custom-call.2} parent=38 // loop_header
                %s123 = sphi 0, %s127
                %p124 = scmp.ge.s32.totalorder %s123, 1
                %s128 = sphi %s101, %s101
                %s129 = sphi %s99, %s99
              $region42: #{custom-call.2} parent=38 // loop_header_branch
                %126 = sbr.rel (%p124) target = $region46
              $region43: #{custom-call.2} parent=38 // loop_body
                %v130 = vld [vmem:[%s128] sm:$0xff]
                %131 = vst [vmem:[%s129] sm:$0xff] %v130
              $region44: #{custom-call.2} parent=38 // loop_footer
                %s127 = sadd.s32 1, %s123
              $region45: #{custom-call.2} parent=38 // loop_footer_branch
                %122 = sbr.rel target = $region41
              $region46: #{custom-call.2} parent=38 // loop_exit
                _
            $region39: #{custom-call.2} parent=23 // pred_fallthru
              _
            // Predicated region
            $region47: #{custom-call.2} parent=23 // pred_check
              _
            $region48: #{custom-call.2} parent=23 // pred_check_branch
              %133 = sbr.rel target = $region50
            $region49: #{custom-call.2} parent=23 // pred_region
              _
            $region50: #{custom-call.2} parent=23 // pred_fallthru
              _
          $region24: #{custom-call.2} parent=19 // pred_fallthru
            _
          // Predicated region
          $region25: #{custom-call.2} parent=19 // pred_check
            _
          $region26: #{custom-call.2} parent=19 // pred_check_branch
            %107 = sbr.rel target = $region28
          $region27: #{custom-call.2} parent=19 // pred_region
            %s109 = ssub.s32 256, 1
            loop: start=0, step=1, limit=1
            $region29: #{custom-call.2} parent=27 // loop_pre_header
              _
            $region30: #{custom-call.2} parent=27 // loop_header
              %s111 = sphi 0, %s115
              %p112 = scmp.ge.s32.totalorder %s111, 1
              %s116 = sphi %s101, %s101
              %s117 = sphi %s99, %s99
            $region31: #{custom-call.2} parent=27 // loop_header_branch
              %114 = sbr.rel (%p112) target = $region35
            $region32: #{custom-call.2} parent=27 // loop_body
              %v118 = vld [vmem:[%s116] sm:%s109]
              %119 = vst [vmem:[%s117] sm:%s109] %v118
            $region33: #{custom-call.2} parent=27 // loop_footer
              %s115 = sadd.s32 1, %s111
            $region34: #{custom-call.2} parent=27 // loop_footer_branch
              %110 = sbr.rel target = $region30
            $region35: #{custom-call.2} parent=27 // loop_exit
              _
          $region28: #{custom-call.2} parent=19 // pred_fallthru
            _
        $region20: #{custom-call.2} parent=15 // pred_fallthru
          _
        %134 = vnop
        %s135 = sand.u32 %s21, 1
        %s136 = sand.u32 %s21, 1
        %s137 = smul.addr %s136, 8
        %s138 = scalar_lea.vmem [#allocation1], %s137
        %s139 = smul.addr %s21, 8
        %s140 = scalar_lea.vmem %s1, %s139
        // Predicated region
        $region51: #{custom-call.2} parent=15 // pred_check
          _
        $region52: #{custom-call.2} parent=15 // pred_check_branch
          %142 = sbr.rel (0) target = $region54
        $region53: #{custom-call.2} parent=15 // pred_region
          // Predicated region
          $region55: #{custom-call.2} parent=53 // pred_check
            _
          $region56: #{custom-call.2} parent=53 // pred_check_branch
            %144 = sbr.rel (0) target = $region58
          $region57: #{custom-call.2} parent=53 // pred_region
            // Predicated region
            $region70: #{custom-call.2} parent=57 // pred_check
              _
            $region71: #{custom-call.2} parent=57 // pred_check_branch
              %160 = sbr.rel (0) target = $region73
            $region72: #{custom-call.2} parent=57 // pred_region
              loop: start=0, step=1, limit=1
              $region74: #{custom-call.2} parent=72 // loop_pre_header
                _
              $region75: #{custom-call.2} parent=72 // loop_header
                %s162 = sphi 0, %s166
                %p163 = scmp.ge.s32.totalorder %s162, 1
                %s167 = sphi %s140, %s140
                %s168 = sphi %s138, %s138
              $region76: #{custom-call.2} parent=72 // loop_header_branch
                %165 = sbr.rel (%p163) target = $region80
              $region77: #{custom-call.2} parent=72 // loop_body
                %v169 = vld [vmem:[%s167] sm:$0xff]
                %170 = vst [vmem:[%s168] sm:$0xff] %v169
              $region78: #{custom-call.2} parent=72 // loop_footer
                %s166 = sadd.s32 1, %s162
              $region79: #{custom-call.2} parent=72 // loop_footer_branch
                %161 = sbr.rel target = $region75
              $region80: #{custom-call.2} parent=72 // loop_exit
                _
            $region73: #{custom-call.2} parent=57 // pred_fallthru
              _
            // Predicated region
            $region81: #{custom-call.2} parent=57 // pred_check
              _
            $region82: #{custom-call.2} parent=57 // pred_check_branch
              %172 = sbr.rel target = $region84
            $region83: #{custom-call.2} parent=57 // pred_region
              _
            $region84: #{custom-call.2} parent=57 // pred_fallthru
              _
          $region58: #{custom-call.2} parent=53 // pred_fallthru
            _
          // Predicated region
          $region59: #{custom-call.2} parent=53 // pred_check
            _
          $region60: #{custom-call.2} parent=53 // pred_check_branch
            %146 = sbr.rel target = $region62
          $region61: #{custom-call.2} parent=53 // pred_region
            %s148 = ssub.s32 256, 1
            loop: start=0, step=1, limit=1
            $region63: #{custom-call.2} parent=61 // loop_pre_header
              _
            $region64: #{custom-call.2} parent=61 // loop_header
              %s150 = sphi 0, %s154
              %p151 = scmp.ge.s32.totalorder %s150, 1
              %s155 = sphi %s140, %s140
              %s156 = sphi %s138, %s138
            $region65: #{custom-call.2} parent=61 // loop_header_branch
              %153 = sbr.rel (%p151) target = $region69
            $region66: #{custom-call.2} parent=61 // loop_body
              %v157 = vld [vmem:[%s155] sm:%s148]
              %158 = vst [vmem:[%s156] sm:%s148] %v157
            $region67: #{custom-call.2} parent=61 // loop_footer
              %s154 = sadd.s32 1, %s150
            $region68: #{custom-call.2} parent=61 // loop_footer_branch
              %149 = sbr.rel target = $region64
            $region69: #{custom-call.2} parent=61 // loop_exit
              _
          $region62: #{custom-call.2} parent=53 // pred_fallthru
            _
        $region54: #{custom-call.2} parent=15 // pred_fallthru
          _
        %173 = vnop
        %s174 = sand.u32 %s21, 1
        %s175 = sand.u32 %s21, 1
        %s176 = smul.addr %s175, 8
        %s177 = scalar_lea.vmem [#allocation2], %s176
        %s178 = smul.addr %s21, 8
        %s179 = scalar_lea.vmem %s2, %s178
        // Predicated region
        $region85: #{custom-call.2} parent=15 // pred_check
          _
        $region86: #{custom-call.2} parent=15 // pred_check_branch
          %181 = sbr.rel (0) target = $region88
        $region87: #{custom-call.2} parent=15 // pred_region
          // Predicated region
          $region89: #{custom-call.2} parent=87 // pred_check
            _
          $region90: #{custom-call.2} parent=87 // pred_check_branch
            %183 = sbr.rel (0) target = $region92
          $region91: #{custom-call.2} parent=87 // pred_region
            // Predicated region
            $region104: #{custom-call.2} parent=91 // pred_check
              _
            $region105: #{custom-call.2} parent=91 // pred_check_branch
              %199 = sbr.rel (0) target = $region107
            $region106: #{custom-call.2} parent=91 // pred_region
              loop: start=0, step=1, limit=1
              $region108: #{custom-call.2} parent=106 // loop_pre_header
                _
              $region109: #{custom-call.2} parent=106 // loop_header
                %s201 = sphi 0, %s205
                %p202 = scmp.ge.s32.totalorder %s201, 1
                %s206 = sphi %s179, %s179
                %s207 = sphi %s177, %s177
              $region110: #{custom-call.2} parent=106 // loop_header_branch
                %204 = sbr.rel (%p202) target = $region114
              $region111: #{custom-call.2} parent=106 // loop_body
                %v208 = vld [vmem:[%s206] sm:$0xff]
                %209 = vst [vmem:[%s207] sm:$0xff] %v208
              $region112: #{custom-call.2} parent=106 // loop_footer
                %s205 = sadd.s32 1, %s201
              $region113: #{custom-call.2} parent=106 // loop_footer_branch
                %200 = sbr.rel target = $region109
              $region114: #{custom-call.2} parent=106 // loop_exit
                _
            $region107: #{custom-call.2} parent=91 // pred_fallthru
              _
            // Predicated region
            $region115: #{custom-call.2} parent=91 // pred_check
              _
            $region116: #{custom-call.2} parent=91 // pred_check_branch
              %211 = sbr.rel target = $region118
            $region117: #{custom-call.2} parent=91 // pred_region
              _
            $region118: #{custom-call.2} parent=91 // pred_fallthru
              _
          $region92: #{custom-call.2} parent=87 // pred_fallthru
            _
          // Predicated region
          $region93: #{custom-call.2} parent=87 // pred_check
            _
          $region94: #{custom-call.2} parent=87 // pred_check_branch
            %185 = sbr.rel target = $region96
          $region95: #{custom-call.2} parent=87 // pred_region
            %s187 = ssub.s32 256, 1
            loop: start=0, step=1, limit=1
            $region97: #{custom-call.2} parent=95 // loop_pre_header
              _
            $region98: #{custom-call.2} parent=95 // loop_header
              %s189 = sphi 0, %s193
              %p190 = scmp.ge.s32.totalorder %s189, 1
              %s194 = sphi %s179, %s179
              %s195 = sphi %s177, %s177
            $region99: #{custom-call.2} parent=95 // loop_header_branch
              %192 = sbr.rel (%p190) target = $region103
            $region100: #{custom-call.2} parent=95 // loop_body
              %v196 = vld [vmem:[%s194] sm:%s187]
              %197 = vst [vmem:[%s195] sm:%s187] %v196
            $region101: #{custom-call.2} parent=95 // loop_footer
              %s193 = sadd.s32 1, %s189
            $region102: #{custom-call.2} parent=95 // loop_footer_branch
              %188 = sbr.rel target = $region98
            $region103: #{custom-call.2} parent=95 // loop_exit
              _
          $region96: #{custom-call.2} parent=87 // pred_fallthru
            _
        $region88: #{custom-call.2} parent=15 // pred_fallthru
          _
        %212 = vnop
        %s213 = sand.u32 %s21, 1
        %s214 = sand.u32 %s21, 1
        %s215 = smul.addr %s214, 8
        %s216 = scalar_lea.vmem [#allocation3], %s215
        %s217 = smul.addr %s21, 8
        %s218 = scalar_lea.vmem %s3, %s217
        // Predicated region
        $region119: #{custom-call.2} parent=15 // pred_check
          _
        $region120: #{custom-call.2} parent=15 // pred_check_branch
          %220 = sbr.rel (0) target = $region122
        $region121: #{custom-call.2} parent=15 // pred_region
          // Predicated region
          $region123: #{custom-call.2} parent=121 // pred_check
            _
          $region124: #{custom-call.2} parent=121 // pred_check_branch
            %222 = sbr.rel (0) target = $region126
          $region125: #{custom-call.2} parent=121 // pred_region
            // Predicated region
            $region138: #{custom-call.2} parent=125 // pred_check
              _
            $region139: #{custom-call.2} parent=125 // pred_check_branch
              %238 = sbr.rel (0) target = $region141
            $region140: #{custom-call.2} parent=125 // pred_region
              loop: start=0, step=1, limit=1
              $region142: #{custom-call.2} parent=140 // loop_pre_header
                _
              $region143: #{custom-call.2} parent=140 // loop_header
                %s240 = sphi 0, %s244
                %p241 = scmp.ge.s32.totalorder %s240, 1
                %s245 = sphi %s218, %s218
                %s246 = sphi %s216, %s216
              $region144: #{custom-call.2} parent=140 // loop_header_branch
                %243 = sbr.rel (%p241) target = $region148
              $region145: #{custom-call.2} parent=140 // loop_body
                %v247 = vld [vmem:[%s245] sm:$0xff]
                %248 = vst [vmem:[%s246] sm:$0xff] %v247
              $region146: #{custom-call.2} parent=140 // loop_footer
                %s244 = sadd.s32 1, %s240
              $region147: #{custom-call.2} parent=140 // loop_footer_branch
                %239 = sbr.rel target = $region143
              $region148: #{custom-call.2} parent=140 // loop_exit
                _
            $region141: #{custom-call.2} parent=125 // pred_fallthru
              _
            // Predicated region
            $region149: #{custom-call.2} parent=125 // pred_check
              _
            $region150: #{custom-call.2} parent=125 // pred_check_branch
              %250 = sbr.rel target = $region152
            $region151: #{custom-call.2} parent=125 // pred_region
              _
            $region152: #{custom-call.2} parent=125 // pred_fallthru
              _
          $region126: #{custom-call.2} parent=121 // pred_fallthru
            _
          // Predicated region
          $region127: #{custom-call.2} parent=121 // pred_check
            _
          $region128: #{custom-call.2} parent=121 // pred_check_branch
            %224 = sbr.rel target = $region130
          $region129: #{custom-call.2} parent=121 // pred_region
            %s226 = ssub.s32 256, 1
            loop: start=0, step=1, limit=1
            $region131: #{custom-call.2} parent=129 // loop_pre_header
              _
            $region132: #{custom-call.2} parent=129 // loop_header
              %s228 = sphi 0, %s232
              %p229 = scmp.ge.s32.totalorder %s228, 1
              %s233 = sphi %s218, %s218
              %s234 = sphi %s216, %s216
            $region133: #{custom-call.2} parent=129 // loop_header_branch
              %231 = sbr.rel (%p229) target = $region137
            $region134: #{custom-call.2} parent=129 // loop_body
              %v235 = vld [vmem:[%s233] sm:%s226]
              %236 = vst [vmem:[%s234] sm:%s226] %v235
            $region135: #{custom-call.2} parent=129 // loop_footer
              %s232 = sadd.s32 1, %s228
            $region136: #{custom-call.2} parent=129 // loop_footer_branch
              %227 = sbr.rel target = $region132
            $region137: #{custom-call.2} parent=129 // loop_exit
              _
          $region130: #{custom-call.2} parent=121 // pred_fallthru
            _
        $region122: #{custom-call.2} parent=15 // pred_fallthru
          _
        %251 = vnop
      $region16: #{custom-call.2} parent=5 // pred_fallthru
        _
      %p252 = scmp.le.s32.totalorder 1, %s21
      %p253 = scmp.lt.s32.totalorder %s21, 6
      %p254 = pnand %p252, %p253
      %p255 = pneg %p254
      // Predicated region
      $region153: #{custom-call.2} parent=5 // pred_check
        _
      $region154: #{custom-call.2} parent=5 // pred_check_branch
        %257 = sbr.rel (%p254) target = $region156
      $region155: #{custom-call.2} parent=5 // pred_region
        #allocation13 [shape = 'f32[8,8]{1,0}', space=vmem, size = 0x1000, scoped, tag = 'a top-left matrix']
        #allocation14 [shape = 'f32[8,8]{1,0}', space=vmem, size = 0x1000, scoped, tag = 'a top-right matrix']
        #allocation15 [shape = 'f32[8,8]{1,0}', space=vmem, size = 0x1000, scoped, tag = 'a bottom-left matrix']
        #allocation16 [shape = 'f32[8,8]{1,0}', space=vmem, size = 0x1000, scoped, tag = 'a bottom-right matrix']
        %s258 = ssub.s32 %s21, 1
        %s259 = sand.u32 %s26, 1
        %s260 = sand.u32 %s26, 1
        %s261 = smul.addr %s260, 8
        %s262 = scalar_lea.vmem [#allocation0], %s261
        %s263 = sand.u32 %s26, 1
        %s264 = sand.u32 %s26, 1
        %s265 = smul.addr %s264, 8
        %s266 = scalar_lea.vmem [#allocation1], %s265
        %s267 = sand.u32 %s26, 1
        %s268 = sand.u32 %s26, 1
        %s269 = smul.addr %s268, 8
        %s270 = scalar_lea.vmem [#allocation2], %s269
        %s271 = sand.u32 %s26, 1
        %s272 = sand.u32 %s26, 1
        %s273 = smul.addr %s272, 8
        %s274 = scalar_lea.vmem [#allocation3], %s273
        %s275 = sand.u32 %s26, 1
        %s276 = sand.u32 %s26, 1
        %s277 = smul.addr %s276, 8
        %s278 = scalar_lea.vmem [#allocation0], %s277
        %s279 = sand.u32 %s26, 1
        %s280 = sand.u32 %s26, 1
        %s281 = smul.addr %s280, 8
        %s282 = scalar_lea.vmem [#allocation1], %s281
        %s283 = sand.u32 %s26, 1
        %s284 = sand.u32 %s26, 1
        %s285 = smul.addr %s284, 8
        %s286 = scalar_lea.vmem [#allocation2], %s285
        %s287 = sand.u32 %s26, 1
        %s288 = sand.u32 %s26, 1
        %s289 = smul.addr %s288, 8
        %s290 = scalar_lea.vmem [#allocation3], %s289
        %p291 = pneg %p49
        %p292 = pneg %p46
        %s293 = sand.u32 %s36, 1
        %s294 = sand.u32 %s36, 1
        %s295 = smul.addr %s294, 8
        %s296 = scalar_lea.vmem [#allocation4], %s295
        %p297 = pneg %p77
        %p298 = pneg %p74
        %s299 = sand.u32 %s64, 1
        %s300 = sand.u32 %s64, 1
        %s301 = smul.addr %s300, 8
        %s302 = scalar_lea.vmem [#allocation5], %s301
        %s303 = sand.u32 %s26, 1
        %s304 = scalar_lea.sflag [#allocation7], %s303
        %s305 = sand.u32 %s26, 1
        %s306 = smul.addr %s305, 8
        %s307 = scalar_lea.vmem [#allocation6], %s306
        %s308 = sand.u32 %s26, 1
        %s309 = scalar_lea.sflag [#allocation9], %s308
        %s310 = sand.u32 %s26, 1
        %s311 = smul.addr %s310, 8
        %s312 = scalar_lea.vmem [#allocation8], %s311
        %s313 = sand.u32 %s26, 1
        %s314 = scalar_lea.sflag [#allocation9], %s313
        %s315 = sand.u32 %s26, 1
        %s316 = smul.addr %s315, 8
        %s317 = scalar_lea.vmem [#allocation10], %s316
        %s318 = sand.u32 %s26, 1
        %s319 = scalar_lea.sflag [#allocation12], %s318
        %s320 = sand.u32 %s26, 1
        %s321 = smul.addr %s320, 8
        %s322 = scalar_lea.vmem [#allocation11], %s321
        %s323 = sshrl.u32 %s26, 3
        %s324 = sshrl.u32 %s26, 3
        %s325 = smov [#allocation13]
        %v326 = vld [vmem:[%s262] sm:$0xff]
        %327 = vst [vmem:[%s325] sm:$0xff] %v326
        %s328 = smov [#allocation14]
        %v329 = vld [vmem:[%s266] sm:$0xff]
        %330 = vst [vmem:[%s328] sm:$0xff] %v329
        %s331 = smov [#allocation15]
        %v332 = vld [vmem:[%s270] sm:$0xff]
        %333 = vst [vmem:[%s331] sm:$0xff] %v332
        %s334 = smov [#allocation16]
        %v335 = vld [vmem:[%s274] sm:$0xff]
        %336 = vst [vmem:[%s334] sm:$0xff] %v335
        %337 = vst [vmem:[%s307] sm:$0xff] 0.0
        %338 = vst [vmem:[%s312] sm:$0xff] 0.0
        %339 = vst [vmem:[%s317] sm:$0xff] 0.0
        %340 = vst [vmem:[%s322] sm:$0xff] 0.0
        %s341 = smov %s307
        %v342 = vlaneseq
        %v343 = vand.u32 %v342, 127
        %v344 = vmov %v343
        %v345 = vlaneseq
        %v346 = vshrl.u32 %v345, 7
        %v347 = vmov %v346
        %v348 = vld [vmem:[%s341] sm:$0xff]
        %vm351 = vcmp.eq.s32.totalorder %v347, %v344
        %v352 = vsel %vm351, 1.0, %v348
        %353 = vst [vmem:[%s341] sm:$0xff] %v352
        %s354 = smov %s322
        %v355 = vlaneseq
        %v356 = vand.u32 %v355, 127
        %v357 = vmov %v356
        %v358 = vlaneseq
        %v359 = vshrl.u32 %v358, 7
        %v360 = vmov %v359
        %v361 = vld [vmem:[%s354] sm:$0xff]
        %vm364 = vcmp.eq.s32.totalorder %v360, %v357
        %v365 = vsel %vm364, 1.0, %v361
        %366 = vst [vmem:[%s354] sm:$0xff] %v365
        // While loop
        $region157: #{custom-call.2} parent=155 // loop_pre_header
          _
        $region158: #{custom-call.2} parent=155 // loop_header
          %s368 = sphi 0, %s910
          %v369 = vlaneseq
          %v370 = vand.u32 %v369, 127
          %v371 = vmov %v370
          %v372 = vlaneseq
          %v373 = vshrl.u32 %v372, 7
          %v374 = vmov %v373
          %s375 = smov [#allocation13]
          %v376 = vlaneseq
          %v377 = vand.u32 %v376, 127
          %vm378 = vcmp.ge.s32.totalorder %v377, 0
          %vm379 = vcmp.lt.s32.totalorder %v377, 8
          %vm380 = vmand %vm378, %vm379
          %v381 = vld [vmem:[%s375] sm:$0xff]
          %v382 = vsel %vm380, %v381, 0.0
          %v383 = vmul.f32 %v382, %v382
          %vm386 = vcmp.eq.s32.totalorder %v374, %v371
          %v387 = vsel %vm386, 0.0, %v383
          %v388 = vlaneseq
          %v389 = vand.u32 %v388, 127
          %v390 = vmov %v389
          %v391 = vlaneseq
          %v392 = vshrl.u32 %v391, 7
          %v393 = vmov %v392
          %s394 = smov [#allocation14]
          %v395 = vlaneseq
          %v396 = vand.u32 %v395, 127
          %vm397 = vcmp.ge.s32.totalorder %v396, 0
          %vm398 = vcmp.lt.s32.totalorder %v396, 8
          %vm399 = vmand %vm397, %vm398
          %v400 = vld [vmem:[%s394] sm:$0xff]
          %v401 = vsel %vm399, %v400, 0.0
          %v402 = vmul.f32 %v401, %v401
          %v403 = vadd.f32 %v387, %v402
          %v404 = vadd.f32 %v383, %v402
          %v405 = vlaneseq
          %v406 = vand.u32 %v405, 127
          %v407 = vmov %v406
          %v408 = vlaneseq
          %v409 = vshrl.u32 %v408, 7
          %v410 = vmov %v409
          %s411 = smov [#allocation15]
          %v412 = vlaneseq
          %v413 = vand.u32 %v412, 127
          %vm414 = vcmp.ge.s32.totalorder %v413, 0
          %vm415 = vcmp.lt.s32.totalorder %v413, 8
          %vm416 = vmand %vm414, %vm415
          %v417 = vld [vmem:[%s411] sm:$0xff]
          %v418 = vsel %vm416, %v417, 0.0
          %v419 = vmul.f32 %v418, %v418
          %v420 = vadd.f32 %v403, %v419
          %v421 = vadd.f32 %v404, %v419
          %v422 = vlaneseq
          %v423 = vand.u32 %v422, 127
          %v424 = vmov %v423
          %v425 = vlaneseq
          %v426 = vshrl.u32 %v425, 7
          %v427 = vmov %v426
          %s428 = smov [#allocation16]
          %v429 = vlaneseq
          %v430 = vand.u32 %v429, 127
          %vm431 = vcmp.ge.s32.totalorder %v430, 0
          %vm432 = vcmp.lt.s32.totalorder %v430, 8
          %vm433 = vmand %vm431, %vm432
          %v434 = vld [vmem:[%s428] sm:$0xff]
          %v435 = vsel %vm433, %v434, 0.0
          %v436 = vmul.f32 %v435, %v435
          %vm439 = vcmp.eq.s32.totalorder %v427, %v424
          %v440 = vsel %vm439, 0.0, %v436
          %v441 = vadd.f32 %v420, %v440
          %v442 = vadd.f32 %v421, %v436
          %443 = vadd.xlane.f32.xlu0 %v442
          %v444 = vpop.xlane.xlu0 %443
          %v445 = vrot.slane %v444, 4
          %v446 = vadd.f32 %v444, %v445
          %v447 = vrot.slane %v446, 2
          %v448 = vadd.f32 %v446, %v447
          %v449 = vrot.slane %v448, 1
          %v450 = vadd.f32 %v448, %v449
          %451 = vadd.xlane.f32.xlu0 %v441
          %v452 = vpop.xlane.xlu0 %451
          %v453 = vrot.slane %v452, 4
          %v454 = vadd.f32 %v452, %v453
          %v455 = vrot.slane %v454, 2
          %v456 = vadd.f32 %v454, %v455
          %v457 = vrot.slane %v456, 1
          %v458 = vadd.f32 %v456, %v457
          %s459 = vtos %v458
          %s460 = vtos %v450
          %s461 = smul.f32 1e-10, %s460
          %p462 = scmp.le.f32.partialorder %s459, %s461
          %p463 = scmp.ge.s32.totalorder %s368, 15
          %p464 = por %p462, %p463
        $region159: #{custom-call.2} parent=155 // loop_header_branch
          %912 = sbr.rel (%p464) target = $region163
        $region160: #{custom-call.2} parent=155 // loop_body
          loop: start=0, step=1, limit=15
          $region164: #{custom-call.2} parent=160 // loop_pre_header
            _
          $region165: #{custom-call.2} parent=160 // loop_header
            %s466 = sphi 0, %s470
            %p467 = scmp.ge.s32.totalorder %s466, 15
          $region166: #{custom-call.2} parent=160 // loop_header_branch
            %469 = sbr.rel (%p467) target = $region170
          $region167: #{custom-call.2} parent=160 // loop_body
            #allocation17 [shape = 'f32[1024]{0}', space=vmem, size = 0x1000, scoped, tag = 'a_tl_diag vmem']
            #allocation18 [shape = 'f32[1024]{0}', space=vmem, size = 0x1000, scoped, tag = 'a_tr_diag vmem']
            #allocation19 [shape = 'f32[1024]{0}', space=vmem, size = 0x1000, scoped, tag = 'a_br_diag vmem']
            #allocation20 [shape = 'f32[1024]{0}', space=vmem, size = 0x1000, scoped, tag = 'rt1 vmem']
            #allocation21 [shape = 'f32[1024]{0}', space=vmem, size = 0x1000, scoped, tag = 'rt2 vmem']
            #allocation22 [shape = 'f32[1024]{0}', space=vmem, size = 0x1000, scoped, tag = 'c vmem']
            #allocation23 [shape = 'f32[1024]{0}', space=vmem, size = 0x1000, scoped, tag = 's vmem']
            #allocation24 [shape = 'f32[4096]{0}', space=vmem, size = 0x4000, scoped, tag = 'c broadcast']
            #allocation25 [shape = 'f32[4096]{0}', space=vmem, size = 0x4000, scoped, tag = 's broadcast']
            %s471 = smov [#allocation13]
            %s472 = smov [#allocation17]
            %v473 = vlaneseq
            %v474 = vand.u32 %v473, 127
            %v475 = vmov %v474
            %v476 = vlaneseq
            %v477 = vshrl.u32 %v476, 7
            %v478 = vmov %v477
            %v479 = vld [vmem:[%s471] sm:$0xff]
            %vm482 = vcmp.eq.s32.totalorder %v478, %v475
            %v483 = vsel %vm482, %v479, 0.0
            %v484 = vrot.slane %v483, 4
            %v485 = vadd.f32 %v483, %v484
            %v486 = vrot.slane %v485, 2
            %v487 = vadd.f32 %v485, %v486
            %v488 = vrot.slane %v487, 1
            %v489 = vadd.f32 %v487, %v488
            %490 = vst [vmem:[%s472] sm:$0x1] %v489
            %s491 = smov [#allocation14]
            %s492 = smov [#allocation18]
            %v493 = vlaneseq
            %v494 = vand.u32 %v493, 127
            %v495 = vmov %v494
            %v496 = vlaneseq
            %v497 = vshrl.u32 %v496, 7
            %v498 = vmov %v497
            %v499 = vld [vmem:[%s491] sm:$0xff]
            %vm502 = vcmp.eq.s32.totalorder %v498, %v495
            %v503 = vsel %vm502, %v499, 0.0
            %v504 = vrot.slane %v503, 4
            %v505 = vadd.f32 %v503, %v504
            %v506 = vrot.slane %v505, 2
            %v507 = vadd.f32 %v505, %v506
            %v508 = vrot.slane %v507, 1
            %v509 = vadd.f32 %v507, %v508
            %510 = vst [vmem:[%s492] sm:$0x1] %v509
            %s511 = smov [#allocation16]
            %s512 = smov [#allocation19]
            %v513 = vlaneseq
            %v514 = vand.u32 %v513, 127
            %v515 = vmov %v514
            %v516 = vlaneseq
            %v517 = vshrl.u32 %v516, 7
            %v518 = vmov %v517
            %v519 = vld [vmem:[%s511] sm:$0xff]
            %vm522 = vcmp.eq.s32.totalorder %v518, %v515
            %v523 = vsel %vm522, %v519, 0.0
            %v524 = vrot.slane %v523, 4
            %v525 = vadd.f32 %v523, %v524
            %v526 = vrot.slane %v525, 2
            %v527 = vadd.f32 %v525, %v526
            %v528 = vrot.slane %v527, 1
            %v529 = vadd.f32 %v527, %v528
            %530 = vst [vmem:[%s512] sm:$0x1] %v529
            %s531 = smov [#allocation22]
            %s532 = smov [#allocation23]
            %s533 = smov [#allocation17]
            %v534 = vld [vmem:[%s533] sm:$0xff]
            %s535 = smov [#allocation18]
            %v536 = vld [vmem:[%s535] sm:$0xff]
            %s537 = smov [#allocation19]
            %v538 = vld [vmem:[%s537] sm:$0xff]
            %v539 = vsub.f32 %v538, %v534
            %v540 = vmul.f32 2.0, %v536
            %v541 = vrcp.pop %v540
            %v542 = vmul.f32 %v539, %v541
            %vm543 = vcmp.ge.f32.partialorder %v542, 0.0
            %v544 = vmul.f32 %v542, %v542
            %v545 = vadd.f32 1.0, %v544
            %v546 = vrsqrt.pop %v545
            %v547 = vmul.f32 %v545, %v546
            %vm548 = vcmp.eq.f32.partialorder %v545, inf
            %v549 = vsel %vm548, %v545, %v547
            %vm550 = vcmp.eq.f32.partialorder %v545, 0.0
            %v551 = vand.u32 %v545, 2147483648
            %v552 = vsel %vm550, %v551, %v549
            %v553 = vxor.u32 %v552, 2147483648
            %v554 = vsel %vm543, %v552, %v553
            %v555 = vadd.f32 %v542, %v554
            %v556 = vrcp.pop %v555
            %v557 = vand.u32 2147483647, %v534
            %v558 = vand.u32 2147483647, %v536
            %v559 = vand.u32 2147483647, %v538
            %v560 = vmin.f32 %v557, %v559
            %v561 = vmul.f32 1.1920929e-08, %v560
            %vm562 = vcmp.le.f32.partialorder %v558, %v561
            %v563 = vsel %vm562, 0.0, %v556
            %v564 = vmul.f32 %v563, %v563
            %v565 = vadd.f32 1.0, %v564
            %v566 = vrsqrt.pop %v565
            %v567 = vmul.f32 %v563, %v566
            %v568 = vmul.f32 %v563, %v536
            %v569 = vsub.f32 %v534, %v568
            %v570 = vmul.f32 %v563, %v536
            %v571 = vadd.f32 %v538, %v570
            %s572 = smov [#allocation20]
            %573 = vst [vmem:[%s572] sm:$0xff] %v569
            %s574 = smov [#allocation21]
            %575 = vst [vmem:[%s574] sm:$0xff] %v571
            %s576 = smov %s531
            %577 = vst [vmem:[%s576] sm:$0xff] %v566
            %s578 = smov %s532
            %579 = vst [vmem:[%s578] sm:$0xff] %v567
            %s580 = smov [#allocation22]
            %v581 = vld [vmem:[%s580] ss:$0 sm:$0xff]
            %v582 = vlaneseq
            %v583 = vand.u32 %v582, 127
            %v584 = vmov %v583
            %v585 = vlaneseq
            %v586 = vshrl.u32 %v585, 7
            %v587 = vmov %v586
            %vm589 = vcmp.eq.s32.totalorder %v587, %v584
            %v590 = vsel %vm589, %v581, 0.0
            %591 = vadd.xlane.f32.xlu0 %v590
            %v592 = vpop.xlane.xlu0 %591
            %s593 = smov [#allocation24]
            %594 = vst [vmem:[%s593] sm:$0xff] %v592
            %s595 = smov [#allocation23]
            %v596 = vld [vmem:[%s595] ss:$0 sm:$0xff]
            %v597 = vlaneseq
            %v598 = vand.u32 %v597, 127
            %v599 = vmov %v598
            %v600 = vlaneseq
            %v601 = vshrl.u32 %v600, 7
            %v602 = vmov %v601
            %vm604 = vcmp.eq.s32.totalorder %v602, %v599
            %v605 = vsel %vm604, %v596, 0.0
            %606 = vadd.xlane.f32.xlu0 %v605
            %v607 = vpop.xlane.xlu0 %606
            %s608 = smov [#allocation25]
            %609 = vst [vmem:[%s608] sm:$0xff] %v607
            %s610 = smov [#allocation24]
            %v611 = vld [vmem:[%s610] sm:$0xff]
            %s612 = smov [#allocation25]
            %v613 = vld [vmem:[%s612] sm:$0xff]
            %s614 = smov [#allocation13]
            %s615 = smov [#allocation14]
            %s616 = smov [#allocation15]
            %s617 = smov [#allocation16]
            %v618 = vld [vmem:[%s614] sm:$0xff]
            %v619 = vld [vmem:[%s615] sm:$0xff]
            %v620 = vld [vmem:[%s616] sm:$0xff]
            %v621 = vld [vmem:[%s617] sm:$0xff]
            %v622 = vmul.f32 %v611, %v618
            %v623 = vmul.f32 %v613, %v620
            %v624 = vsub.f32 %v622, %v623
            %v625 = vmul.f32 %v611, %v619
            %v626 = vmul.f32 %v613, %v621
            %v627 = vsub.f32 %v625, %v626
            %v628 = vmul.f32 %v613, %v618
            %v629 = vmul.f32 %v611, %v620
            %v630 = vadd.f32 %v628, %v629
            %v631 = vmul.f32 %v613, %v619
            %v632 = vmul.f32 %v611, %v621
            %v633 = vadd.f32 %v631, %v632
            %634 = vst [vmem:[%s614] sm:$0xff] %v624
            %635 = vst [vmem:[%s615] sm:$0xff] %v627
            %636 = vst [vmem:[%s616] sm:$0xff] %v630
            %637 = vst [vmem:[%s617] sm:$0xff] %v633
            %s638 = smov [#allocation22]
            %v639 = vld [vmem:[%s638] ss:$0 sm:$0xff]
            %s640 = smov [#allocation23]
            %v641 = vld [vmem:[%s640] ss:$0 sm:$0xff]
            %s642 = smov [#allocation13]
            %s643 = smov [#allocation14]
            %s644 = smov [#allocation15]
            %s645 = smov [#allocation16]
            %v646 = vld [vmem:[%s642] sm:$0xff]
            %v647 = vld [vmem:[%s643] sm:$0xff]
            %v648 = vld [vmem:[%s644] sm:$0xff]
            %v649 = vld [vmem:[%s645] sm:$0xff]
            %v650 = vmul.f32 %v639, %v646
            %v651 = vmul.f32 %v641, %v647
            %v652 = vsub.f32 %v650, %v651
            %v653 = vmul.f32 %v641, %v646
            %v654 = vmul.f32 %v639, %v647
            %v655 = vadd.f32 %v653, %v654
            %v656 = vmul.f32 %v639, %v648
            %v657 = vmul.f32 %v641, %v649
            %v658 = vsub.f32 %v656, %v657
            %v659 = vmul.f32 %v641, %v648
            %v660 = vmul.f32 %v639, %v649
            %v661 = vadd.f32 %v659, %v660
            %662 = vst [vmem:[%s642] sm:$0xff] %v652
            %663 = vst [vmem:[%s643] sm:$0xff] %v655
            %664 = vst [vmem:[%s644] sm:$0xff] %v658
            %665 = vst [vmem:[%s645] sm:$0xff] %v661
            %s666 = smov [#allocation13]
            %s667 = smov [#allocation20]
            %v668 = vlaneseq
            %v669 = vand.u32 %v668, 127
            %v670 = vmov %v669
            %v671 = vlaneseq
            %v672 = vshrl.u32 %v671, 7
            %v673 = vmov %v672
            %v674 = vld [vmem:[%s667] ss:$0 sm:$0xff]
            %v675 = vld [vmem:[%s666] sm:$0xff]
            %vm678 = vcmp.eq.s32.totalorder %v673, %v670
            %v679 = vsel %vm678, %v674, %v675
            %680 = vst [vmem:[%s666] sm:$0xff] %v679
            %s681 = smov [#allocation14]
            %v682 = vlaneseq
            %v683 = vand.u32 %v682, 127
            %v684 = vmov %v683
            %v685 = vlaneseq
            %v686 = vshrl.u32 %v685, 7
            %v687 = vmov %v686
            %v688 = vld [vmem:[%s681] sm:$0xff]
            %vm691 = vcmp.eq.s32.totalorder %v687, %v684
            %v692 = vsel %vm691, 0.0, %v688
            %693 = vst [vmem:[%s681] sm:$0xff] %v692
            %s694 = smov [#allocation15]
            %v695 = vlaneseq
            %v696 = vand.u32 %v695, 127
            %v697 = vmov %v696
            %v698 = vlaneseq
            %v699 = vshrl.u32 %v698, 7
            %v700 = vmov %v699
            %v701 = vld [vmem:[%s694] sm:$0xff]
            %vm704 = vcmp.eq.s32.totalorder %v700, %v697
            %v705 = vsel %vm704, 0.0, %v701
            %706 = vst [vmem:[%s694] sm:$0xff] %v705
            %s707 = smov [#allocation16]
            %s708 = smov [#allocation21]
            %v709 = vlaneseq
            %v710 = vand.u32 %v709, 127
            %v711 = vmov %v710
            %v712 = vlaneseq
            %v713 = vshrl.u32 %v712, 7
            %v714 = vmov %v713
            %v715 = vld [vmem:[%s708] ss:$0 sm:$0xff]
            %v716 = vld [vmem:[%s707] sm:$0xff]
            %vm719 = vcmp.eq.s32.totalorder %v714, %v711
            %v720 = vsel %vm719, %v715, %v716
            %721 = vst [vmem:[%s707] sm:$0xff] %v720
            %s722 = smov [#allocation13]
            %s723 = smov [#allocation14]
            %v724 = vld [vmem:[%s723] sm:$0xff]
            %725 = vrot.lane.b32.xlu0 %v724, 1
            %v726 = vpop.permute.xlu0 %725
            %v727 = vld [vmem:[%s722] sm:$0xff]
            %v728 = vld [vmem:[%s722] sm:$0xff]
            %729 = vrot.lane.b32.xlu0 %v728, 1
            %v730 = vpop.permute.xlu0 %729
            %v731 = vlaneseq
            %v732 = vand.u32 %v731, 127
            %vm733 = vcmp.eq.s32.totalorder %v732, 0
            %v734 = vsel %vm733, %v728, %v730
            %v735 = vlaneseq
            %v736 = vand.u32 %v735, 127
            %vm737 = vcmp.eq.s32.totalorder %v736, 1
            %v738 = vsel %vm737, %v726, %v734
            %v739 = vlaneseq
            %v740 = vand.u32 %v739, 127
            %vm741 = vcmp.ge.s32.totalorder %v740, 0
            %vm742 = vcmp.lt.s32.totalorder %v740, 8
            %vm743 = vmand %vm741, %vm742
            %v744 = vsel %vm743, %v738, 0.0
            %v745 = vld [vmem:[%s723] sm:$0xff]
            %746 = vrot.lane.b32.xlu0 %v745, 127
            %v747 = vpop.permute.xlu0 %746
            %v748 = vlaneseq
            %v749 = vand.u32 %v748, 127
            %vm750 = vcmp.eq.s32.totalorder %v749, 7
            %v751 = vsel %vm750, %v727, %v747
            %752 = vst [vmem:[%s722] sm:$0xff] %v744
            %753 = vst [vmem:[%s723] sm:$0xff] %v751
            %s754 = smov [#allocation15]
            %s755 = smov [#allocation16]
            %v756 = vld [vmem:[%s755] sm:$0xff]
            %757 = vrot.lane.b32.xlu0 %v756, 1
            %v758 = vpop.permute.xlu0 %757
            %v759 = vld [vmem:[%s754] sm:$0xff]
            %v760 = vld [vmem:[%s754] sm:$0xff]
            %761 = vrot.lane.b32.xlu0 %v760, 1
            %v762 = vpop.permute.xlu0 %761
            %v763 = vlaneseq
            %v764 = vand.u32 %v763, 127
            %vm765 = vcmp.eq.s32.totalorder %v764, 0
            %v766 = vsel %vm765, %v760, %v762
            %v767 = vlaneseq
            %v768 = vand.u32 %v767, 127
            %vm769 = vcmp.eq.s32.totalorder %v768, 1
            %v770 = vsel %vm769, %v758, %v766
            %v771 = vlaneseq
            %v772 = vand.u32 %v771, 127
            %vm773 = vcmp.ge.s32.totalorder %v772, 0
            %vm774 = vcmp.lt.s32.totalorder %v772, 8
            %vm775 = vmand %vm773, %vm774
            %v776 = vsel %vm775, %v770, 0.0
            %v777 = vld [vmem:[%s755] sm:$0xff]
            %778 = vrot.lane.b32.xlu0 %v777, 127
            %v779 = vpop.permute.xlu0 %778
            %v780 = vlaneseq
            %v781 = vand.u32 %v780, 127
            %vm782 = vcmp.eq.s32.totalorder %v781, 7
            %v783 = vsel %vm782, %v759, %v779
            %784 = vst [vmem:[%s754] sm:$0xff] %v776
            %785 = vst [vmem:[%s755] sm:$0xff] %v783
            %s786 = smov [#allocation13]
            %s787 = smov [#allocation15]
            %v788 = vld [vmem:[%s786] ss:$0 sm:$0xff]
            %s790 = scalar_lea.vmem %s786, 4294967295
            %v791 = vld [vmem:[%s790] sm:$0xfe]
            %v792 = vlaneseq
            %v793 = vshrl.u32 %v792, 7
            %vm794 = vcmp.eq.s32.totalorder %v793, 0
            %v795 = vsel %vm794, %v788, %v791
            %s796 = scalar_lea.vmem %s786, 7
            %v797 = vld [vmem:[%s796] ss:$0 sm:$0xff]
            %798 = vst [vmem:[%s786] sm:$0xff] %v795
            %v799 = vld [vmem:[%s787] ss:$0 sm:$0xff]
            %s800 = scalar_lea.vmem %s786, 1
            %801 = vst [vmem:[%s800] sm:$0x1] %v799
            %s802 = scalar_lea.vmem %s787, 1
            %v803 = vld [vmem:[%s802] sm:$0x7f]
            %v804 = vlaneseq
            %v805 = vshrl.u32 %v804, 7
            %vm806 = vcmp.eq.s32.totalorder %v805, 7
            %v807 = vsel %vm806, %v797, %v803
            %v808 = vld [vmem:[%s787] ss:$0 sm:$0xff]
            %809 = vst [vmem:[%s787] sm:$0xff] %v807
            %s810 = smov [#allocation14]
            %s811 = smov [#allocation16]
            %v812 = vld [vmem:[%s810] ss:$0 sm:$0xff]
            %s814 = scalar_lea.vmem %s810, 4294967295
            %v815 = vld [vmem:[%s814] sm:$0xfe]
            %v816 = vlaneseq
            %v817 = vshrl.u32 %v816, 7
            %vm818 = vcmp.eq.s32.totalorder %v817, 0
            %v819 = vsel %vm818, %v812, %v815
            %s820 = scalar_lea.vmem %s810, 7
            %v821 = vld [vmem:[%s820] ss:$0 sm:$0xff]
            %822 = vst [vmem:[%s810] sm:$0xff] %v819
            %v823 = vld [vmem:[%s811] ss:$0 sm:$0xff]
            %s824 = scalar_lea.vmem %s810, 1
            %825 = vst [vmem:[%s824] sm:$0x1] %v823
            %s826 = scalar_lea.vmem %s811, 1
            %v827 = vld [vmem:[%s826] sm:$0x7f]
            %v828 = vlaneseq
            %v829 = vshrl.u32 %v828, 7
            %vm830 = vcmp.eq.s32.totalorder %v829, 7
            %v831 = vsel %vm830, %v821, %v827
            %v832 = vld [vmem:[%s811] ss:$0 sm:$0xff]
            %833 = vst [vmem:[%s811] sm:$0xff] %v831
            %s834 = smov [#allocation24]
            %v835 = vld [vmem:[%s834] sm:$0xff]
            %s836 = smov [#allocation25]
            %v837 = vld [vmem:[%s836] sm:$0xff]
            %s838 = smov %s307
            %s839 = smov %s312
            %s840 = smov %s317
            %s841 = smov %s322
            %v842 = vld [vmem:[%s838] sm:$0xff]
            %v843 = vld [vmem:[%s839] sm:$0xff]
            %v844 = vld [vmem:[%s840] sm:$0xff]
            %v845 = vld [vmem:[%s841] sm:$0xff]
            %v846 = vmul.f32 %v835, %v842
            %v847 = vmul.f32 %v837, %v844
            %v848 = vsub.f32 %v846, %v847
            %v849 = vmul.f32 %v835, %v843
            %v850 = vmul.f32 %v837, %v845
            %v851 = vsub.f32 %v849, %v850
            %v852 = vmul.f32 %v837, %v842
            %v853 = vmul.f32 %v835, %v844
            %v854 = vadd.f32 %v852, %v853
            %v855 = vmul.f32 %v837, %v843
            %v856 = vmul.f32 %v835, %v845
            %v857 = vadd.f32 %v855, %v856
            %858 = vst [vmem:[%s838] sm:$0xff] %v848
            %859 = vst [vmem:[%s839] sm:$0xff] %v851
            %860 = vst [vmem:[%s840] sm:$0xff] %v854
            %861 = vst [vmem:[%s841] sm:$0xff] %v857
            %s862 = smov %s307
            %s863 = smov %s317
            %v864 = vld [vmem:[%s862] ss:$0 sm:$0xff]
            %s866 = scalar_lea.vmem %s862, 4294967295
            %v867 = vld [vmem:[%s866] sm:$0xfe]
            %v868 = vlaneseq
            %v869 = vshrl.u32 %v868, 7
            %vm870 = vcmp.eq.s32.totalorder %v869, 0
            %v871 = vsel %vm870, %v864, %v867
            %s872 = scalar_lea.vmem %s862, 7
            %v873 = vld [vmem:[%s872] ss:$0 sm:$0xff]
            %874 = vst [vmem:[%s862] sm:$0xff] %v871
            %v875 = vld [vmem:[%s863] ss:$0 sm:$0xff]
            %s876 = scalar_lea.vmem %s862, 1
            %877 = vst [vmem:[%s876] sm:$0x1] %v875
            %s878 = scalar_lea.vmem %s863, 1
            %v879 = vld [vmem:[%s878] sm:$0x7f]
            %v880 = vlaneseq
            %v881 = vshrl.u32 %v880, 7
            %vm882 = vcmp.eq.s32.totalorder %v881, 7
            %v883 = vsel %vm882, %v873, %v879
            %v884 = vld [vmem:[%s863] ss:$0 sm:$0xff]
            %885 = vst [vmem:[%s863] sm:$0xff] %v883
            %s886 = smov %s312
            %s887 = smov %s322
            %v888 = vld [vmem:[%s886] ss:$0 sm:$0xff]
            %s890 = scalar_lea.vmem %s886, 4294967295
            %v891 = vld [vmem:[%s890] sm:$0xfe]
            %v892 = vlaneseq
            %v893 = vshrl.u32 %v892, 7
            %vm894 = vcmp.eq.s32.totalorder %v893, 0
            %v895 = vsel %vm894, %v888, %v891
            %s896 = scalar_lea.vmem %s886, 7
            %v897 = vld [vmem:[%s896] ss:$0 sm:$0xff]
            %898 = vst [vmem:[%s886] sm:$0xff] %v895
            %v899 = vld [vmem:[%s887] ss:$0 sm:$0xff]
            %s900 = scalar_lea.vmem %s886, 1
            %901 = vst [vmem:[%s900] sm:$0x1] %v899
            %s902 = scalar_lea.vmem %s887, 1
            %v903 = vld [vmem:[%s902] sm:$0x7f]
            %v904 = vlaneseq
            %v905 = vshrl.u32 %v904, 7
            %vm906 = vcmp.eq.s32.totalorder %v905, 7
            %v907 = vsel %vm906, %v897, %v903
            %v908 = vld [vmem:[%s887] ss:$0 sm:$0xff]
            %909 = vst [vmem:[%s887] sm:$0xff] %v907
          $region168: #{custom-call.2} parent=160 // loop_footer
            %s470 = sadd.s32 1, %s466
          $region169: #{custom-call.2} parent=160 // loop_footer_branch
            %465 = sbr.rel target = $region165
          $region170: #{custom-call.2} parent=160 // loop_exit
            _
          %s910 = sadd.s32 %s368, 1
        $region161: #{custom-call.2} parent=155 // loop_footer
          _
        $region162: #{custom-call.2} parent=155 // loop_footer_branch
          %367 = sbr.rel target = $region158
        $region163: #{custom-call.2} parent=155 // loop_exit
          _
        %s913 = sand.u32 %s26, 7
        %s914 = scalar_lea.vmem %s296, %s913 [#allocation4]
        %s915 = sand.u32 %s26, 7
        %s916 = scalar_lea.vmem %s302, %s915 [#allocation5]
        %s917 = smov [#allocation13]
        %s918 = smov %s914
        %v919 = vlaneseq
        %v920 = vand.u32 %v919, 127
        %v921 = vmov %v920
        %v922 = vlaneseq
        %v923 = vshrl.u32 %v922, 7
        %v924 = vmov %v923
        %v925 = vld [vmem:[%s917] sm:$0xff]
        %vm928 = vcmp.eq.s32.totalorder %v924, %v921
        %v929 = vsel %vm928, %v925, 0.0
        %v930 = vrot.slane %v929, 4
        %v931 = vadd.f32 %v929, %v930
        %v932 = vrot.slane %v931, 2
        %v933 = vadd.f32 %v931, %v932
        %v934 = vrot.slane %v933, 1
        %v935 = vadd.f32 %v933, %v934
        %936 = vst [vmem:[%s918] sm:$0x1] %v935
        %s937 = smov [#allocation16]
        %s938 = smov %s916
        %v939 = vlaneseq
        %v940 = vand.u32 %v939, 127
        %v941 = vmov %v940
        %v942 = vlaneseq
        %v943 = vshrl.u32 %v942, 7
        %v944 = vmov %v943
        %v945 = vld [vmem:[%s937] sm:$0xff]
        %vm948 = vcmp.eq.s32.totalorder %v944, %v941
        %v949 = vsel %vm948, %v945, 0.0
        %v950 = vrot.slane %v949, 4
        %v951 = vadd.f32 %v949, %v950
        %v952 = vrot.slane %v951, 2
        %v953 = vadd.f32 %v951, %v952
        %v954 = vrot.slane %v953, 1
        %v955 = vadd.f32 %v953, %v954
        %956 = vst [vmem:[%s938] sm:$0x1] %v955
        %s957 = sand.u32 %s36, 1
        %s958 = sand.u32 %s36, 1
        %s959 = smul.addr %s958, 8
        %s960 = scalar_lea.vmem [#allocation4], %s959
        %s961 = sand.u32 %s64, 1
        %s962 = sand.u32 %s64, 1
        %s963 = smul.addr %s962, 8
        %s964 = scalar_lea.vmem [#allocation5], %s963
        %s965 = sand.u32 %s26, 1
        %s966 = scalar_lea.sflag [#allocation7], %s965
        %s967 = sand.u32 %s26, 1
        %s968 = smul.addr %s967, 8
        %s969 = scalar_lea.vmem [#allocation6], %s968
        %s970 = sand.u32 %s26, 1
        %s971 = scalar_lea.sflag [#allocation9], %s970
        %s972 = sand.u32 %s26, 1
        %s973 = smul.addr %s972, 8
        %s974 = scalar_lea.vmem [#allocation8], %s973
        %s975 = sand.u32 %s26, 1
        %s976 = scalar_lea.sflag [#allocation9], %s975
        %s977 = sand.u32 %s26, 1
        %s978 = smul.addr %s977, 8
        %s979 = scalar_lea.vmem [#allocation10], %s978
        %s980 = sand.u32 %s26, 1
        %s981 = scalar_lea.sflag [#allocation12], %s980
        %s982 = sand.u32 %s26, 1
        %s983 = smul.addr %s982, 8
        %s984 = scalar_lea.vmem [#allocation11], %s983
        // Predicated region
        $region171: #{custom-call.2} parent=155 // pred_check
          %p985 = pneg %p46
        $region172: #{custom-call.2} parent=155 // pred_check_branch
          %987 = sbr.rel (%p985) target = $region174
        $region173: #{custom-call.2} parent=155 // pred_region
          %s988 = sshrl.u32 %s26, 3
          %s989 = smul.addr %s988, 8
          %s990 = scalar_lea.vmem %s4, %s989
          // Predicated region
          $region175: #{custom-call.2} parent=173 // pred_check
            _
          $region176: #{custom-call.2} parent=173 // pred_check_branch
            %992 = sbr.rel (0) target = $region178
          $region177: #{custom-call.2} parent=173 // pred_region
            // Predicated region
            $region179: #{custom-call.2} parent=177 // pred_check
              _
            $region180: #{custom-call.2} parent=177 // pred_check_branch
              %994 = sbr.rel (0) target = $region182
            $region181: #{custom-call.2} parent=177 // pred_region
              // Predicated region
              $region194: #{custom-call.2} parent=181 // pred_check
                _
              $region195: #{custom-call.2} parent=181 // pred_check_branch
                %1010 = sbr.rel (0) target = $region197
              $region196: #{custom-call.2} parent=181 // pred_region
                loop: start=0, step=1, limit=1
                $region198: #{custom-call.2} parent=196 // loop_pre_header
                  _
                $region199: #{custom-call.2} parent=196 // loop_header
                  %s1012 = sphi 0, %s1016
                  %p1013 = scmp.ge.s32.totalorder %s1012, 1
                  %s1017 = sphi %s960, %s960
                  %s1018 = sphi %s990, %s990
                $region200: #{custom-call.2} parent=196 // loop_header_branch
                  %1015 = sbr.rel (%p1013) target = $region204
                $region201: #{custom-call.2} parent=196 // loop_body
                  %v1019 = vld [vmem:[%s1017] sm:$0xff]
                  %1020 = vst [vmem:[%s1018] sm:$0xff] %v1019
                $region202: #{custom-call.2} parent=196 // loop_footer
                  %s1016 = sadd.s32 1, %s1012
                $region203: #{custom-call.2} parent=196 // loop_footer_branch
                  %1011 = sbr.rel target = $region199
                $region204: #{custom-call.2} parent=196 // loop_exit
                  _
              $region197: #{custom-call.2} parent=181 // pred_fallthru
                _
              // Predicated region
              $region205: #{custom-call.2} parent=181 // pred_check
                _
              $region206: #{custom-call.2} parent=181 // pred_check_branch
                %1022 = sbr.rel target = $region208
              $region207: #{custom-call.2} parent=181 // pred_region
                _
              $region208: #{custom-call.2} parent=181 // pred_fallthru
                _
            $region182: #{custom-call.2} parent=177 // pred_fallthru
              _
            // Predicated region
            $region183: #{custom-call.2} parent=177 // pred_check
              _
            $region184: #{custom-call.2} parent=177 // pred_check_branch
              %996 = sbr.rel target = $region186
            $region185: #{custom-call.2} parent=177 // pred_region
              %s998 = ssub.s32 256, 1
              loop: start=0, step=1, limit=1
              $region187: #{custom-call.2} parent=185 // loop_pre_header
                _
              $region188: #{custom-call.2} parent=185 // loop_header
                %s1000 = sphi 0, %s1004
                %p1001 = scmp.ge.s32.totalorder %s1000, 1
                %s1005 = sphi %s960, %s960
                %s1006 = sphi %s990, %s990
              $region189: #{custom-call.2} parent=185 // loop_header_branch
                %1003 = sbr.rel (%p1001) target = $region193
              $region190: #{custom-call.2} parent=185 // loop_body
                %v1007 = vld [vmem:[%s1005] sm:%s998]
                %1008 = vst [vmem:[%s1006] sm:%s998] %v1007
              $region191: #{custom-call.2} parent=185 // loop_footer
                %s1004 = sadd.s32 1, %s1000
              $region192: #{custom-call.2} parent=185 // loop_footer_branch
                %999 = sbr.rel target = $region188
              $region193: #{custom-call.2} parent=185 // loop_exit
                _
            $region186: #{custom-call.2} parent=177 // pred_fallthru
              _
          $region178: #{custom-call.2} parent=173 // pred_fallthru
            _
          %1023 = vnop
        $region174: #{custom-call.2} parent=155 // pred_fallthru
          _
        // Predicated region
        $region209: #{custom-call.2} parent=155 // pred_check
          %p1024 = pneg %p74
        $region210: #{custom-call.2} parent=155 // pred_check_branch
          %1026 = sbr.rel (%p1024) target = $region212
        $region211: #{custom-call.2} parent=155 // pred_region
          %s1027 = sshrl.u32 %s26, 3
          %s1028 = smul.addr %s1027, 8
          %s1029 = scalar_lea.vmem %s5, %s1028
          // Predicated region
          $region213: #{custom-call.2} parent=211 // pred_check
            _
          $region214: #{custom-call.2} parent=211 // pred_check_branch
            %1031 = sbr.rel (0) target = $region216
          $region215: #{custom-call.2} parent=211 // pred_region
            // Predicated region
            $region217: #{custom-call.2} parent=215 // pred_check
              _
            $region218: #{custom-call.2} parent=215 // pred_check_branch
              %1033 = sbr.rel (0) target = $region220
            $region219: #{custom-call.2} parent=215 // pred_region
              // Predicated region
              $region232: #{custom-call.2} parent=219 // pred_check
                _
              $region233: #{custom-call.2} parent=219 // pred_check_branch
                %1049 = sbr.rel (0) target = $region235
              $region234: #{custom-call.2} parent=219 // pred_region
                loop: start=0, step=1, limit=1
                $region236: #{custom-call.2} parent=234 // loop_pre_header
                  _
                $region237: #{custom-call.2} parent=234 // loop_header
                  %s1051 = sphi 0, %s1055
                  %p1052 = scmp.ge.s32.totalorder %s1051, 1
                  %s1056 = sphi %s964, %s964
                  %s1057 = sphi %s1029, %s1029
                $region238: #{custom-call.2} parent=234 // loop_header_branch
                  %1054 = sbr.rel (%p1052) target = $region242
                $region239: #{custom-call.2} parent=234 // loop_body
                  %v1058 = vld [vmem:[%s1056] sm:$0xff]
                  %1059 = vst [vmem:[%s1057] sm:$0xff] %v1058
                $region240: #{custom-call.2} parent=234 // loop_footer
                  %s1055 = sadd.s32 1, %s1051
                $region241: #{custom-call.2} parent=234 // loop_footer_branch
                  %1050 = sbr.rel target = $region237
                $region242: #{custom-call.2} parent=234 // loop_exit
                  _
              $region235: #{custom-call.2} parent=219 // pred_fallthru
                _
              // Predicated region
              $region243: #{custom-call.2} parent=219 // pred_check
                _
              $region244: #{custom-call.2} parent=219 // pred_check_branch
                %1061 = sbr.rel target = $region246
              $region245: #{custom-call.2} parent=219 // pred_region
                _
              $region246: #{custom-call.2} parent=219 // pred_fallthru
                _
            $region220: #{custom-call.2} parent=215 // pred_fallthru
              _
            // Predicated region
            $region221: #{custom-call.2} parent=215 // pred_check
              _
            $region222: #{custom-call.2} parent=215 // pred_check_branch
              %1035 = sbr.rel target = $region224
            $region223: #{custom-call.2} parent=215 // pred_region
              %s1037 = ssub.s32 256, 1
              loop: start=0, step=1, limit=1
              $region225: #{custom-call.2} parent=223 // loop_pre_header
                _
              $region226: #{custom-call.2} parent=223 // loop_header
                %s1039 = sphi 0, %s1043
                %p1040 = scmp.ge.s32.totalorder %s1039, 1
                %s1044 = sphi %s964, %s964
                %s1045 = sphi %s1029, %s1029
              $region227: #{custom-call.2} parent=223 // loop_header_branch
                %1042 = sbr.rel (%p1040) target = $region231
              $region228: #{custom-call.2} parent=223 // loop_body
                %v1046 = vld [vmem:[%s1044] sm:%s1037]
                %1047 = vst [vmem:[%s1045] sm:%s1037] %v1046
              $region229: #{custom-call.2} parent=223 // loop_footer
                %s1043 = sadd.s32 1, %s1039
              $region230: #{custom-call.2} parent=223 // loop_footer_branch
                %1038 = sbr.rel target = $region226
              $region231: #{custom-call.2} parent=223 // loop_exit
                _
            $region224: #{custom-call.2} parent=215 // pred_fallthru
              _
          $region216: #{custom-call.2} parent=211 // pred_fallthru
            _
          %1062 = vnop
        $region212: #{custom-call.2} parent=155 // pred_fallthru
          _
        %s1064 = ssub.s32 128, 128
        %1065 = vsyncadd %s966, %s1064
        %s1066 = smul.addr %s26, 128
        %s1067 = scalar_lea.hbm %s6, %s1066
        %s1069 = sshll.u32 %s969, 4
        %s1070 = int_to_ptr.vmem [resolvable:$true] %s1069
        %1072 = dma.vmem_to_hbm [thread:$0]  %s1070, 128, %s1067, %s966
        %s1074 = ssub.s32 128, 128
        %1075 = vsyncadd %s971, %s1074
        %s1076 = smul.addr %s26, 128
        %s1077 = scalar_lea.hbm %s7, %s1076
        %s1079 = sshll.u32 %s974, 4
        %s1080 = int_to_ptr.vmem [resolvable:$true] %s1079
        %1082 = dma.vmem_to_hbm [thread:$0]  %s1080, 128, %s1077, %s971
        %s1084 = ssub.s32 128, 128
        %1085 = vsyncadd %s976, %s1084
        %s1086 = smul.addr %s26, 128
        %s1087 = scalar_lea.hbm %s8, %s1086
        %s1089 = sshll.u32 %s979, 4
        %s1090 = int_to_ptr.vmem [resolvable:$true] %s1089
        %1092 = dma.vmem_to_hbm [thread:$0]  %s1090, 128, %s1087, %s976
        %s1094 = ssub.s32 128, 128
        %1095 = vsyncadd %s981, %s1094
        %s1096 = smul.addr %s26, 128
        %s1097 = scalar_lea.hbm %s9, %s1096
        %s1099 = sshll.u32 %s984, 4
        %s1100 = int_to_ptr.vmem [resolvable:$true] %s1099
        %1102 = dma.vmem_to_hbm [thread:$0]  %s1100, 128, %s1097, %s981
      $region156: #{custom-call.2} parent=5 // pred_fallthru
        _
      %p1103 = scmp.le.s32.totalorder 2, %s21
      // Predicated region
      $region247: #{custom-call.2} parent=5 // pred_check
        %p1104 = pneg %p1103
      $region248: #{custom-call.2} parent=5 // pred_check_branch
        %1106 = sbr.rel (%p1104) target = $region250
      $region249: #{custom-call.2} parent=5 // pred_region
        %s1107 = ssub.s32 %s21, 2
        // Predicated region
        $region251: #{custom-call.2} parent=249 // pred_check
          %p1108 = pneg %p52
        $region252: #{custom-call.2} parent=249 // pred_check_branch
          %1110 = sbr.rel (%p1108) target = $region254
        $region253: #{custom-call.2} parent=249 // pred_region
          %s1111 = sand.u32 %s37, 1
          %s1112 = sand.u32 %s37, 1
          %s1113 = smul.addr %s1112, 8
          %s1114 = scalar_lea.vmem [#allocation4], %s1113
        $region254: #{custom-call.2} parent=249 // pred_fallthru
          _
        // Predicated region
        $region255: #{custom-call.2} parent=249 // pred_check
          %p1115 = pneg %p80
        $region256: #{custom-call.2} parent=249 // pred_check_branch
          %1117 = sbr.rel (%p1115) target = $region258
        $region257: #{custom-call.2} parent=249 // pred_region
          %s1118 = sand.u32 %s65, 1
          %s1119 = sand.u32 %s65, 1
          %s1120 = smul.addr %s1119, 8
          %s1121 = scalar_lea.vmem [#allocation5], %s1120
        $region258: #{custom-call.2} parent=249 // pred_fallthru
          _
        %s1122 = sand.u32 %s27, 1
        %s1123 = scalar_lea.sflag [#allocation7], %s1122
        %s1124 = sand.u32 %s27, 1
        %s1125 = smul.addr %s1124, 8
        %s1126 = scalar_lea.vmem [#allocation6], %s1125
        %1127 = dma.done %s1123, 128
        %s1128 = sand.u32 %s27, 1
        %s1129 = scalar_lea.sflag [#allocation9], %s1128
        %s1130 = sand.u32 %s27, 1
        %s1131 = smul.addr %s1130, 8
        %s1132 = scalar_lea.vmem [#allocation8], %s1131
        %1133 = dma.done %s1129, 128
        %s1134 = sand.u32 %s27, 1
        %s1135 = scalar_lea.sflag [#allocation9], %s1134
        %s1136 = sand.u32 %s27, 1
        %s1137 = smul.addr %s1136, 8
        %s1138 = scalar_lea.vmem [#allocation10], %s1137
        %1139 = dma.done %s1135, 128
        %s1140 = sand.u32 %s27, 1
        %s1141 = scalar_lea.sflag [#allocation12], %s1140
        %s1142 = sand.u32 %s27, 1
        %s1143 = smul.addr %s1142, 8
        %s1144 = scalar_lea.vmem [#allocation11], %s1143
        %1145 = dma.done %s1141, 128
      $region250: #{custom-call.2} parent=5 // pred_fallthru
        _
    $region6: #{custom-call.2} parent=1 // loop_footer
      %s25 = sadd.s32 1, %s21
    $region7: #{custom-call.2} parent=1 // loop_footer_branch
      %20 = sbr.rel target = $region3
    $region8: #{custom-call.2} parent=1 // loop_exit
      _
    %1146 = vsyncpa [#allocation7], 1
    %s1147 = scalar_lea.sflag [#allocation7], 1
    %1148 = vsyncpa %s1147, 1
    %1149 = vsyncpa [#allocation9], 1
    %s1150 = scalar_lea.sflag [#allocation9], 1
    %1151 = vsyncpa %s1150, 1
    %1152 = vsyncpa [#allocation12], 1
    %s1153 = scalar_lea.sflag [#allocation12], 1
    %1154 = vsyncpa %s1153, 1

// kernel: landaloss.1
$region0: #{landaloss.1}
  #allocation0 [shape = 'u32[]', space=smem, size = 0x4, offset = 0x4, fixed_abs, tag = 'smem constant byte address 0x4 - core index']
  #allocation1 [shape = 'u32[144,128]{1,0:T(1,128)}', space=vmem, size = 0x12000, scoped, tag = 'internal scratch']
  %s0 = inlined_call_operand.vmem [shape: f32[5,16,8], index: 0, kind: input, shape index: {}]
  %s1 = inlined_call_operand.vmem [shape: f32[5,16,16], index: 1, kind: output, shape index: {}]
  %s2 = sld [smem:[#allocation0]]
  $region14: #{landaloss.1} parent=0
    _
  %s4 = ssub.s32 1, %s2
  %s5 = scalar_select 0, %s4, %s2
  // Predicated region
  $region2: #{landaloss.1} parent=0 // pred_check
    _
  $region3: #{landaloss.1} parent=0 // pred_check_branch
    %7 = sbr.rel (0) target = $region5
  $region4: #{landaloss.1} parent=0 // pred_region
    _
  $region5: #{landaloss.1} parent=0 // pred_fallthru
    _
  %v9 = vld [vmem:[%s0] sm:$0xff]
  %v10 = vld [vmem:[%s0 + $0x8] sm:$0xff]
  %v11 = vld [vmem:[%s0 + $0x10] sm:$0xff]
  %v12 = vld [vmem:[%s0 + $0x18] sm:$0xff]
  %v13 = vld [vmem:[%s0 + $0x20] sm:$0xff]
  %v14 = vld [vmem:[%s0 + $0x28] sm:$0xff]
  %v15 = vld [vmem:[%s0 + $0x30] sm:$0xff]
  %v16 = vld [vmem:[%s0 + $0x38] sm:$0xff]
  %v17 = vld [vmem:[%s0 + $0x40] sm:$0xff]
  %v18 = vld [vmem:[%s0 + $0x48] sm:$0xff]
  %v19 = vmul.f32 %v9, %v9
  %v20 = vmul.f32 %v10, %v10
  %v21 = vmul.f32 %v11, %v11
  %v22 = vmul.f32 %v12, %v12
  %v23 = vmul.f32 %v13, %v13
  %v24 = vmul.f32 %v14, %v14
  %v25 = vmul.f32 %v15, %v15
  %v26 = vmul.f32 %v16, %v16
  %v27 = vmul.f32 %v17, %v17
  %v28 = vmul.f32 %v18, %v18
  %vm29 = vcmask 64512
  %v30 = vsel %vm29, %v19, 0.0
  %31 = vadd.xlane.f32.xlu0 %v30
  %v32 = vpop.xlane.xlu0 %31
  %v33 = vsel %vm29, %v20, 0.0
  %34 = vadd.xlane.f32.xlu0 %v33
  %v35 = vpop.xlane.xlu0 %34
  %v36 = vsel %vm29, %v21, 0.0
  %37 = vadd.xlane.f32.xlu0 %v36
  %v38 = vpop.xlane.xlu0 %37
  %v39 = vsel %vm29, %v22, 0.0
  %40 = vadd.xlane.f32.xlu0 %v39
  %v41 = vpop.xlane.xlu0 %40
  %v42 = vsel %vm29, %v23, 0.0
  %43 = vadd.xlane.f32.xlu0 %v42
  %v44 = vpop.xlane.xlu0 %43
  %v45 = vsel %vm29, %v24, 0.0
  %46 = vadd.xlane.f32.xlu0 %v45
  %v47 = vpop.xlane.xlu0 %46
  %v48 = vsel %vm29, %v25, 0.0
  %49 = vadd.xlane.f32.xlu0 %v48
  %v50 = vpop.xlane.xlu0 %49
  %v51 = vsel %vm29, %v26, 0.0
  %52 = vadd.xlane.f32.xlu0 %v51
  %v53 = vpop.xlane.xlu0 %52
  %v54 = vsel %vm29, %v27, 0.0
  %55 = vadd.xlane.f32.xlu0 %v54
  %v56 = vpop.xlane.xlu0 %55
  %v57 = vsel %vm29, %v28, 0.0
  %58 = vadd.xlane.f32.xlu0 %v57
  %v59 = vpop.xlane.xlu0 %58
  %v60 = vmax.f32 %v32, 1e-24
  %v61 = vmax.f32 %v35, 1e-24
  %v62 = vmax.f32 %v38, 1e-24
  %v63 = vmax.f32 %v41, 1e-24
  %v64 = vmax.f32 %v44, 1e-24
  %v65 = vmax.f32 %v47, 1e-24
  %v66 = vmax.f32 %v50, 1e-24
  %v67 = vmax.f32 %v53, 1e-24
  %v68 = vmax.f32 %v56, 1e-24
  %v69 = vmax.f32 %v59, 1e-24
  %v70 = vrsqrt.pop %v60
  %v71 = vrsqrt.pop %v61
  %v72 = vrsqrt.pop %v62
  %v73 = vrsqrt.pop %v63
  %v74 = vrsqrt.pop %v64
  %v75 = vrsqrt.pop %v65
  %v76 = vrsqrt.pop %v66
  %v77 = vrsqrt.pop %v67
  %v78 = vrsqrt.pop %v68
  %v79 = vrsqrt.pop %v69
  %v80 = vmul.f32 %v9, %v70
  %v81 = vmul.f32 %v10, %v71
  %v82 = vmul.f32 %v11, %v72
  %v83 = vmul.f32 %v12, %v73
  %v84 = vmul.f32 %v13, %v74
  %v85 = vmul.f32 %v14, %v75
  %v86 = vmul.f32 %v15, %v76
  %v87 = vmul.f32 %v16, %v77
  %v88 = vmul.f32 %v17, %v78
  %v89 = vmul.f32 %v18, %v79
  %v90 = vpack.c.bf16 %v81, %v80
  %v91 = vpack.c.bf16 %v83, %v82
  %v92 = vpack.c.bf16 %v85, %v84
  %v93 = vpack.c.bf16 %v87, %v86
  %v94 = vpack.c.bf16 %v89, %v88
  %v96 = vsel %vm29, %v90, 0
  %98 = vmatprep.subr.bf16.mxu0 0
  %99 = vmatpush1.bf16.xpose.msra.mxu0 0
  %100 = vmatprep.subr.bf16.mxu0 0
  %101 = vmatpush1.bf16.xpose.msra.mxu0 0
  %102 = vmatprep.subr.bf16.mxu0 0
  %103 = vmatpush1.bf16.xpose.msra.mxu0 0
  %104 = vmatprep.subr.bf16.mxu0 0
  %105 = vmatpush1.bf16.xpose.msra.mxu0 0
  %106 = vmatprep.subr.bf16.mxu0 0
  %107 = vmatpush1.bf16.xpose.msra.mxu0 0
  %108 = vmatprep.subr.bf16.mxu0 0
  %109 = vmatpush1.bf16.xpose.msra.mxu0 0
  %110 = vmatprep.subr.bf16.mxu0 0
  %111 = vmatpush1.bf16.xpose.msra.mxu0 0
  %112 = vmatprep.subr.bf16.mxu0 0
  %113 = vmatpush1.bf16.xpose.msra.mxu0 %v96
  %114 = vmatprep.subr.bf16.mxu0 0
  %115 = vmatpush2.bf16.xpose.msra.mxu0 0
  %116 = vmatprep.subr.bf16.mxu0 0
  %117 = vmatpush2.bf16.xpose.msra.mxu0 0
  %118 = vmatprep.subr.bf16.mxu0 0
  %119 = vmatpush2.bf16.xpose.msra.mxu0 0
  %120 = vmatprep.subr.bf16.mxu0 0
  %121 = vmatpush2.bf16.xpose.msra.mxu0 0
  %122 = vmatprep.subr.bf16.mxu0 0
  %123 = vmatpush2.bf16.xpose.msra.mxu0 0
  %124 = vmatprep.subr.bf16.mxu0 0
  %125 = vmatpush2.bf16.xpose.msra.mxu0 0
  %126 = vmatprep.subr.bf16.mxu0 0
  %127 = vmatpush2.bf16.xpose.msra.mxu0 0
  %128 = vmatprep.subr.bf16.mxu0 0
  %129 = vmatpush2.bf16.xpose.msra.mxu0 0
  %130 = vmatprep.mubr.bf16.mxu0 0
  %131 = vmatmul.mubr.bf16.gmra.mxu0 %v96
  %v132 = vpop.f32.mrf.mxu0
  %v133 = vadd.f32 0.0, %v132
  %v134 = vpop.f32.mrf.mxu0
  %v135 = vpop.f32.mrf.mxu0
  %v136 = vadd.f32 0.0, %v135
  %v137 = vpop.f32.mrf.mxu0
  %138 = vdwg.mxu0
  %v140 = vsel %vm29, %v91, 0
  %142 = vmatprep.subr.bf16.mxu0 0
  %143 = vmatpush1.bf16.xpose.msra.mxu0 0
  %144 = vmatprep.subr.bf16.mxu0 0
  %145 = vmatpush1.bf16.xpose.msra.mxu0 0
  %146 = vmatprep.subr.bf16.mxu0 0
  %147 = vmatpush1.bf16.xpose.msra.mxu0 0
  %148 = vmatprep.subr.bf16.mxu0 0
  %149 = vmatpush1.bf16.xpose.msra.mxu0 0
  %150 = vmatprep.subr.bf16.mxu0 0
  %151 = vmatpush1.bf16.xpose.msra.mxu0 0
  %152 = vmatprep.subr.bf16.mxu0 0
  %153 = vmatpush1.bf16.xpose.msra.mxu0 0
  %154 = vmatprep.subr.bf16.mxu0 0
  %155 = vmatpush1.bf16.xpose.msra.mxu0 0
  %156 = vmatprep.subr.bf16.mxu0 0
  %157 = vmatpush1.bf16.xpose.msra.mxu0 %v140
  %158 = vmatprep.subr.bf16.mxu0 0
  %159 = vmatpush2.bf16.xpose.msra.mxu0 0
  %160 = vmatprep.subr.bf16.mxu0 0
  %161 = vmatpush2.bf16.xpose.msra.mxu0 0
  %162 = vmatprep.subr.bf16.mxu0 0
  %163 = vmatpush2.bf16.xpose.msra.mxu0 0
  %164 = vmatprep.subr.bf16.mxu0 0
  %165 = vmatpush2.bf16.xpose.msra.mxu0 0
  %166 = vmatprep.subr.bf16.mxu0 0
  %167 = vmatpush2.bf16.xpose.msra.mxu0 0
  %168 = vmatprep.subr.bf16.mxu0 0
  %169 = vmatpush2.bf16.xpose.msra.mxu0 0
  %170 = vmatprep.subr.bf16.mxu0 0
  %171 = vmatpush2.bf16.xpose.msra.mxu0 0
  %172 = vmatprep.subr.bf16.mxu0 0
  %173 = vmatpush2.bf16.xpose.msra.mxu0 0
  %174 = vmatprep.mubr.bf16.mxu0 0
  %175 = vmatmul.mubr.bf16.gmra.mxu0 %v140
  %v176 = vpop.f32.mrf.mxu0
  %v177 = vadd.f32 0.0, %v176
  %v178 = vpop.f32.mrf.mxu0
  %v179 = vpop.f32.mrf.mxu0
  %v180 = vadd.f32 0.0, %v179
  %v181 = vpop.f32.mrf.mxu0
  %182 = vdwg.mxu0
  %v184 = vsel %vm29, %v92, 0
  %186 = vmatprep.subr.bf16.mxu0 0
  %187 = vmatpush1.bf16.xpose.msra.mxu0 0
  %188 = vmatprep.subr.bf16.mxu0 0
  %189 = vmatpush1.bf16.xpose.msra.mxu0 0
  %190 = vmatprep.subr.bf16.mxu0 0
  %191 = vmatpush1.bf16.xpose.msra.mxu0 0
  %192 = vmatprep.subr.bf16.mxu0 0
  %193 = vmatpush1.bf16.xpose.msra.mxu0 0
  %194 = vmatprep.subr.bf16.mxu0 0
  %195 = vmatpush1.bf16.xpose.msra.mxu0 0
  %196 = vmatprep.subr.bf16.mxu0 0
  %197 = vmatpush1.bf16.xpose.msra.mxu0 0
  %198 = vmatprep.subr.bf16.mxu0 0
  %199 = vmatpush1.bf16.xpose.msra.mxu0 0
  %200 = vmatprep.subr.bf16.mxu0 0
  %201 = vmatpush1.bf16.xpose.msra.mxu0 %v184
  %202 = vmatprep.subr.bf16.mxu0 0
  %203 = vmatpush2.bf16.xpose.msra.mxu0 0
  %204 = vmatprep.subr.bf16.mxu0 0
  %205 = vmatpush2.bf16.xpose.msra.mxu0 0
  %206 = vmatprep.subr.bf16.mxu0 0
  %207 = vmatpush2.bf16.xpose.msra.mxu0 0
  %208 = vmatprep.subr.bf16.mxu0 0
  %209 = vmatpush2.bf16.xpose.msra.mxu0 0
  %210 = vmatprep.subr.bf16.mxu0 0
  %211 = vmatpush2.bf16.xpose.msra.mxu0 0
  %212 = vmatprep.subr.bf16.mxu0 0
  %213 = vmatpush2.bf16.xpose.msra.mxu0 0
  %214 = vmatprep.subr.bf16.mxu0 0
  %215 = vmatpush2.bf16.xpose.msra.mxu0 0
  %216 = vmatprep.subr.bf16.mxu0 0
  %217 = vmatpush2.bf16.xpose.msra.mxu0 0
  %218 = vmatprep.mubr.bf16.mxu0 0
  %219 = vmatmul.mubr.bf16.gmra.mxu0 %v184
  %v220 = vpop.f32.mrf.mxu0
  %v221 = vadd.f32 0.0, %v220
  %v222 = vpop.f32.mrf.mxu0
  %v223 = vpop.f32.mrf.mxu0
  %v224 = vadd.f32 0.0, %v223
  %v225 = vpop.f32.mrf.mxu0
  %226 = vdwg.mxu0
  %v228 = vsel %vm29, %v93, 0
  %230 = vmatprep.subr.bf16.mxu0 0
  %231 = vmatpush1.bf16.xpose.msra.mxu0 0
  %232 = vmatprep.subr.bf16.mxu0 0
  %233 = vmatpush1.bf16.xpose.msra.mxu0 0
  %234 = vmatprep.subr.bf16.mxu0 0
  %235 = vmatpush1.bf16.xpose.msra.mxu0 0
  %236 = vmatprep.subr.bf16.mxu0 0
  %237 = vmatpush1.bf16.xpose.msra.mxu0 0
  %238 = vmatprep.subr.bf16.mxu0 0
  %239 = vmatpush1.bf16.xpose.msra.mxu0 0
  %240 = vmatprep.subr.bf16.mxu0 0
  %241 = vmatpush1.bf16.xpose.msra.mxu0 0
  %242 = vmatprep.subr.bf16.mxu0 0
  %243 = vmatpush1.bf16.xpose.msra.mxu0 0
  %244 = vmatprep.subr.bf16.mxu0 0
  %245 = vmatpush1.bf16.xpose.msra.mxu0 %v228
  %246 = vmatprep.subr.bf16.mxu0 0
  %247 = vmatpush2.bf16.xpose.msra.mxu0 0
  %248 = vmatprep.subr.bf16.mxu0 0
  %249 = vmatpush2.bf16.xpose.msra.mxu0 0
  %250 = vmatprep.subr.bf16.mxu0 0
  %251 = vmatpush2.bf16.xpose.msra.mxu0 0
  %252 = vmatprep.subr.bf16.mxu0 0
  %253 = vmatpush2.bf16.xpose.msra.mxu0 0
  %254 = vmatprep.subr.bf16.mxu0 0
  %255 = vmatpush2.bf16.xpose.msra.mxu0 0
  %256 = vmatprep.subr.bf16.mxu0 0
  %257 = vmatpush2.bf16.xpose.msra.mxu0 0
  %258 = vmatprep.subr.bf16.mxu0 0
  %259 = vmatpush2.bf16.xpose.msra.mxu0 0
  %260 = vmatprep.subr.bf16.mxu0 0
  %261 = vmatpush2.bf16.xpose.msra.mxu0 0
  %262 = vmatprep.mubr.bf16.mxu0 0
  %263 = vmatmul.mubr.bf16.gmra.mxu0 %v228
  %v264 = vpop.f32.mrf.mxu0
  %v265 = vadd.f32 0.0, %v264
  %v266 = vpop.f32.mrf.mxu0
  %v267 = vpop.f32.mrf.mxu0
  %v268 = vadd.f32 0.0, %v267
  %v269 = vpop.f32.mrf.mxu0
  %270 = vdwg.mxu0
  %v272 = vsel %vm29, %v94, 0
  %274 = vmatprep.subr.bf16.mxu0 0
  %275 = vmatpush1.bf16.xpose.msra.mxu0 0
  %276 = vmatprep.subr.bf16.mxu0 0
  %277 = vmatpush1.bf16.xpose.msra.mxu0 0
  %278 = vmatprep.subr.bf16.mxu0 0
  %279 = vmatpush1.bf16.xpose.msra.mxu0 0
  %280 = vmatprep.subr.bf16.mxu0 0
  %281 = vmatpush1.bf16.xpose.msra.mxu0 0
  %282 = vmatprep.subr.bf16.mxu0 0
  %283 = vmatpush1.bf16.xpose.msra.mxu0 0
  %284 = vmatprep.subr.bf16.mxu0 0
  %285 = vmatpush1.bf16.xpose.msra.mxu0 0
  %286 = vmatprep.subr.bf16.mxu0 0
  %287 = vmatpush1.bf16.xpose.msra.mxu0 0
  %288 = vmatprep.subr.bf16.mxu0 0
  %289 = vmatpush1.bf16.xpose.msra.mxu0 %v272
  %290 = vmatprep.subr.bf16.mxu0 0
  %291 = vmatpush2.bf16.xpose.msra.mxu0 0
  %292 = vmatprep.subr.bf16.mxu0 0
  %293 = vmatpush2.bf16.xpose.msra.mxu0 0
  %294 = vmatprep.subr.bf16.mxu0 0
  %295 = vmatpush2.bf16.xpose.msra.mxu0 0
  %296 = vmatprep.subr.bf16.mxu0 0
  %297 = vmatpush2.bf16.xpose.msra.mxu0 0
  %298 = vmatprep.subr.bf16.mxu0 0
  %299 = vmatpush2.bf16.xpose.msra.mxu0 0
  %300 = vmatprep.subr.bf16.mxu0 0
  %301 = vmatpush2.bf16.xpose.msra.mxu0 0
  %302 = vmatprep.subr.bf16.mxu0 0
  %303 = vmatpush2.bf16.xpose.msra.mxu0 0
  %304 = vmatprep.subr.bf16.mxu0 0
  %305 = vmatpush2.bf16.xpose.msra.mxu0 0
  %306 = vmatprep.mubr.bf16.mxu0 0
  %307 = vmatmul.mubr.bf16.gmra.mxu0 %v272
  %v308 = vpop.f32.mrf.mxu0
  %v309 = vadd.f32 0.0, %v308
  %v310 = vpop.f32.mrf.mxu0
  %v311 = vpop.f32.mrf.mxu0
  %v312 = vadd.f32 0.0, %v311
  %v313 = vpop.f32.mrf.mxu0
  %314 = vdwg.mxu0
  %v315 = vmax.f32 %v133, 0.0
  %v316 = vmax.f32 %v136, 0.0
  %v317 = vmax.f32 %v177, 0.0
  %v318 = vmax.f32 %v180, 0.0
  %v319 = vmax.f32 %v221, 0.0
  %v320 = vmax.f32 %v224, 0.0
  %v321 = vmax.f32 %v265, 0.0
  %v322 = vmax.f32 %v268, 0.0
  %v323 = vmax.f32 %v309, 0.0
  %v324 = vmax.f32 %v312, 0.0
  %vm325 = vcmask 130048
  %v326 = vsel %vm325, %v315, 0.0
  %327 = vadd.xlane.f32.xlu0 %v326
  %v328 = vpop.xlane.xlu0 %327
  %v329 = vsel %vm325, %v316, 0.0
  %330 = vadd.xlane.f32.xlu0 %v329
  %v331 = vpop.xlane.xlu0 %330
  %v332 = vsel %vm325, %v317, 0.0
  %333 = vadd.xlane.f32.xlu0 %v332
  %v334 = vpop.xlane.xlu0 %333
  %v335 = vsel %vm325, %v318, 0.0
  %336 = vadd.xlane.f32.xlu0 %v335
  %v337 = vpop.xlane.xlu0 %336
  %v338 = vsel %vm325, %v319, 0.0
  %339 = vadd.xlane.f32.xlu0 %v338
  %v340 = vpop.xlane.xlu0 %339
  %v341 = vsel %vm325, %v320, 0.0
  %342 = vadd.xlane.f32.xlu0 %v341
  %v343 = vpop.xlane.xlu0 %342
  %v344 = vsel %vm325, %v321, 0.0
  %345 = vadd.xlane.f32.xlu0 %v344
  %v346 = vpop.xlane.xlu0 %345
  %v347 = vsel %vm325, %v322, 0.0
  %348 = vadd.xlane.f32.xlu0 %v347
  %v349 = vpop.xlane.xlu0 %348
  %v350 = vsel %vm325, %v323, 0.0
  %351 = vadd.xlane.f32.xlu0 %v350
  %v352 = vpop.xlane.xlu0 %351
  %v353 = vsel %vm325, %v324, 0.0
  %354 = vadd.xlane.f32.xlu0 %v353
  %v355 = vpop.xlane.xlu0 %354
  %v356 = vadd.f32 %v326, %v329
  %v357 = vrot.slane %v356, 4
  %v358 = vadd.f32 %v356, %v357
  %v359 = vrot.slane %v358, 2
  %v360 = vadd.f32 %v358, %v359
  %v361 = vrot.slane %v360, 1
  %v362 = vadd.f32 %v360, %v361
  %v363 = vadd.f32 %v332, %v335
  %v364 = vrot.slane %v363, 4
  %v365 = vadd.f32 %v363, %v364
  %v366 = vrot.slane %v365, 2
  %v367 = vadd.f32 %v365, %v366
  %v368 = vrot.slane %v367, 1
  %v369 = vadd.f32 %v367, %v368
  %v370 = vadd.f32 %v338, %v341
  %v371 = vrot.slane %v370, 4
  %v372 = vadd.f32 %v370, %v371
  %v373 = vrot.slane %v372, 2
  %v374 = vadd.f32 %v372, %v373
  %v375 = vrot.slane %v374, 1
  %v376 = vadd.f32 %v374, %v375
  %v377 = vadd.f32 %v344, %v347
  %v378 = vrot.slane %v377, 4
  %v379 = vadd.f32 %v377, %v378
  %v380 = vrot.slane %v379, 2
  %v381 = vadd.f32 %v379, %v380
  %v382 = vrot.slane %v381, 1
  %v383 = vadd.f32 %v381, %v382
  %v384 = vadd.f32 %v350, %v353
  %v385 = vrot.slane %v384, 4
  %v386 = vadd.f32 %v384, %v385
  %v387 = vrot.slane %v386, 2
  %v388 = vadd.f32 %v386, %v387
  %v389 = vrot.slane %v388, 1
  %v390 = vadd.f32 %v388, %v389
  %v391 = vmax.f32 %v328, 1e-12
  %v392 = vmax.f32 %v331, 1e-12
  %v393 = vmax.f32 %v334, 1e-12
  %v394 = vmax.f32 %v337, 1e-12
  %v395 = vmax.f32 %v340, 1e-12
  %v396 = vmax.f32 %v343, 1e-12
  %v397 = vmax.f32 %v346, 1e-12
  %v398 = vmax.f32 %v349, 1e-12
  %v399 = vmax.f32 %v352, 1e-12
  %v400 = vmax.f32 %v355, 1e-12
  %v401 = vrsqrt.pop %v391
  %v402 = vrsqrt.pop %v392
  %v403 = vrsqrt.pop %v393
  %v404 = vrsqrt.pop %v394
  %v405 = vrsqrt.pop %v395
  %v406 = vrsqrt.pop %v396
  %v407 = vrsqrt.pop %v397
  %v408 = vrsqrt.pop %v398
  %v409 = vrsqrt.pop %v399
  %v410 = vrsqrt.pop %v400
  %v411 = vsub.f32 0.0, %v401
  %v412 = vsub.f32 0.0, %v402
  %v413 = vsub.f32 0.0, %v403
  %v414 = vsub.f32 0.0, %v404
  %v415 = vsub.f32 0.0, %v405
  %v416 = vsub.f32 0.0, %v406
  %v417 = vsub.f32 0.0, %v407
  %v418 = vsub.f32 0.0, %v408
  %v419 = vsub.f32 0.0, %v409
  %v420 = vsub.f32 0.0, %v410
  %v421 = vmax.f32 %v362, 1e-12
  %v422 = vmax.f32 %v369, 1e-12
  %v423 = vmax.f32 %v376, 1e-12
  %v424 = vmax.f32 %v383, 1e-12
  %v425 = vmax.f32 %v390, 1e-12
  %v426 = vrsqrt.pop %v421
  %v427 = vrsqrt.pop %v422
  %v428 = vrsqrt.pop %v423
  %v429 = vrsqrt.pop %v424
  %v430 = vrsqrt.pop %v425
  %v431 = vmul.f32 %v315, %v411
  %v432 = vmul.f32 %v316, %v412
  %v433 = vmul.f32 %v317, %v413
  %v434 = vmul.f32 %v318, %v414
  %v435 = vmul.f32 %v319, %v415
  %v436 = vmul.f32 %v320, %v416
  %v437 = vmul.f32 %v321, %v417
  %v438 = vmul.f32 %v322, %v418
  %v439 = vmul.f32 %v323, %v419
  %v440 = vmul.f32 %v324, %v420
  %v441 = vmul.f32 %v431, %v426
  %v442 = vmul.f32 %v432, %v426
  %v443 = vmul.f32 %v433, %v427
  %v444 = vmul.f32 %v434, %v427
  %v445 = vmul.f32 %v435, %v428
  %v446 = vmul.f32 %v436, %v428
  %v447 = vmul.f32 %v437, %v429
  %v448 = vmul.f32 %v438, %v429
  %v449 = vmul.f32 %v439, %v430
  %v450 = vmul.f32 %v440, %v430
  %v451 = vlaneseq
  %v452 = vshrl.u32 %v451, 7
  %v453 = vadd.s32 %v452, 8
  %v454 = vlaneseq
  %v455 = vand.u32 %v454, 127
  %vm456 = vcmp.eq.s32.totalorder %v452, %v455
  %vm457 = vcmp.eq.s32.totalorder %v453, %v455
  %v458 = vadd.f32 %v441, 1.0
  %v459 = vadd.f32 %v442, 1.0
  %v460 = vadd.f32 %v443, 1.0
  %v461 = vadd.f32 %v444, 1.0
  %v462 = vadd.f32 %v445, 1.0
  %v463 = vadd.f32 %v446, 1.0
  %v464 = vadd.f32 %v447, 1.0
  %v465 = vadd.f32 %v448, 1.0
  %v466 = vadd.f32 %v449, 1.0
  %v467 = vadd.f32 %v450, 1.0
  %v468 = vsel %vm456, %v458, %v441
  %v469 = vsel %vm457, %v459, %v442
  %v470 = vsel %vm456, %v460, %v443
  %v471 = vsel %vm457, %v461, %v444
  %v472 = vsel %vm456, %v462, %v445
  %v473 = vsel %vm457, %v463, %v446
  %v474 = vsel %vm456, %v464, %v447
  %v475 = vsel %vm457, %v465, %v448
  %v476 = vsel %vm456, %v466, %v449
  %v477 = vsel %vm457, %v467, %v450
  %478 = vst.msk [vmem:[%s1] sm:$0xff] %vm325, %v468
  %479 = vst.msk [vmem:[%s1 + $0x8] sm:$0xff] %vm325, %v469
  %480 = vst.msk [vmem:[%s1 + $0x10] sm:$0xff] %vm325, %v470
  %481 = vst.msk [vmem:[%s1 + $0x18] sm:$0xff] %vm325, %v471
  %482 = vst.msk [vmem:[%s1 + $0x20] sm:$0xff] %vm325, %v472
  %483 = vst.msk [vmem:[%s1 + $0x28] sm:$0xff] %vm325, %v473
  %484 = vst.msk [vmem:[%s1 + $0x30] sm:$0xff] %vm325, %v474
  %485 = vst.msk [vmem:[%s1 + $0x38] sm:$0xff] %vm325, %v475
  %486 = vst.msk [vmem:[%s1 + $0x40] sm:$0xff] %vm325, %v476
  %487 = vst.msk [vmem:[%s1 + $0x48] sm:$0xff] %vm325, %v477
  // Predicated region
  $region6: #{landaloss.1} parent=0 // pred_check
    _
  $region7: #{landaloss.1} parent=0 // pred_check_branch
    %489 = sbr.rel (0) target = $region9
  $region8: #{landaloss.1} parent=0 // pred_region
    _
  $region9: #{landaloss.1} parent=0 // pred_fallthru
    _
  // Predicated region
  $region10: #{landaloss.1} parent=0 // pred_check
    _
  $region11: #{landaloss.1} parent=0 // pred_check_branch
    %491 = sbr.rel (0) target = $region13
  $region12: #{landaloss.1} parent=0 // pred_region
    _
  $region13: #{landaloss.1} parent=0 // pred_fallthru
    _

</llo_original>
